<compile_context>
chip_gen: v6e
topology: v6e:2x2x1
jax: 0.10.0
libtpu: 0.0.40
codegen_flags: <defaults>
</compile_context>

<pallas_src>
import functools

import jax
import jax.numpy as jnp
from jax import lax
from jax.experimental import pallas as pl
from jax.experimental.pallas import tpu as pltpu


def _round_up(v, m):
    return (v + m - 1) // m * m


# ----------------------------------------------------------------------------
# Fused kernel: running channel max/sum -> aligned zero halo -> 7x7 conv ->
# sigmoid.  Grid = (batch, channel-chunks); channel chunks accumulate into
# persistent VMEM scratch, conv runs on the last chunk.
# ----------------------------------------------------------------------------
def _spatial_attention_kernel(x_ref, w_ref, b_ref, o_ref, mx_ref, sm_ref,
                              *, K, TOP):
    P = K // 2
    H, W = o_ref.shape
    c_idx = pl.program_id(1)
    n_c = pl.num_programs(1)

    # Per-chunk channel pooling (on-VPU cast; sum accumulates in f32).
    x = x_ref[...].astype(jnp.float32)          # (c_block, H, W)
    cmax = jnp.max(x, axis=0)                   # (H, W)
    csum = jnp.sum(x, axis=0)                   # (H, W)

    @pl.when(c_idx == 0)
    def _init():
        # Zero the halo once per batch element; interior is overwritten below
        # every chunk, the border is never touched again.
        mx_ref[...] = jnp.zeros_like(mx_ref)
        sm_ref[...] = jnp.zeros_like(sm_ref)
        mx_ref[TOP:TOP + H, 0:W] = cmax
        sm_ref[TOP:TOP + H, 0:W] = csum

    @pl.when(c_idx > 0)
    def _accum():
        mx_ref[TOP:TOP + H, 0:W] = jnp.maximum(mx_ref[TOP:TOP + H, 0:W], cmax)
        sm_ref[TOP:TOP + H, 0:W] = sm_ref[TOP:TOP + H, 0:W] + csum

    @pl.when(c_idx == n_c - 1)
    def _conv():
        wpad = mx_ref.shape[1]
        mxp = mx_ref[...]                       # (HPAD, WPAD), halo == 0
        smp = sm_ref[...]

        # 4 independent accumulators break the 98-tap serial VALU chain.
        accs = [jnp.zeros((H, W), jnp.float32) for _ in range(4)]
        t = 0
        r0 = TOP - P
        for dj in range(K):                     # lane shifts hoisted: 14 rolls
            shift = (P - dj) % wpad             # wrap brings in zeroed columns
            m_dj = pltpu.roll(mxp, shift=shift, axis=1)
            s_dj = pltpu.roll(smp, shift=shift, axis=1)
            for di in range(K):                 # sublane-offset slices + FMAs
                r = r0 + di
                wm = w_ref[di * K + dj]              # weight[0,0,di,dj] (max)
                ws = w_ref[K * K + di * K + dj]      # weight[0,1,di,dj] / C
                accs[t % 4] = accs[t % 4] + wm * m_dj[r:r + H, 0:W]
                accs[(t + 1) % 4] = accs[(t + 1) % 4] + ws * s_dj[r:r + H, 0:W]
                t += 2

        res = (accs[0] + accs[1]) + (accs[2] + accs[3]) + b_ref[0]
        o_ref[...] = jax.nn.sigmoid(res).astype(o_ref.dtype)


# ----------------------------------------------------------------------------
# Wrapper: NCHW in / NCHW out, PyTorch Conv2d(2, 1, K, padding=K//2) params.
# ----------------------------------------------------------------------------
def spatial_attention(x, weight, bias, *, kernel_size=7, c_block=None):
    """x: (N, C, H, W); weight: (1, 2, K, K); bias: (1,). Returns (N, 1, H, W)."""
    N, C, H, W = x.shape
    K = kernel_size
    P = K // 2

    if c_block is None:
        c_block = C
    assert C % c_block == 0, "C must be divisible by c_block (no ragged chunk)"
    n_c = C // c_block

    TOP = _round_up(max(P, 1), 8)          # sublane-aligned top halo (8 for K=7)
    HPAD = _round_up(TOP + H + P, 8)
    WPAD = _round_up(W + P, 128)           # circular-wrap left halo needs >= W+P

    # Flatten conv params for SMEM; fold the mean's 1/C into the avg-path taps
    # so the kernel only ever accumulates a channel sum.
    w = weight.astype(jnp.float32)
    w_flat = jnp.concatenate([w[0, 0].reshape(-1), (w[0, 1] / C).reshape(-1)])
    b_flat = bias.reshape(1).astype(jnp.float32)

    flops = N * H * W * (2 * C + 4 * K * K)
    bytes_accessed = (N * C * H * W * x.dtype.itemsize
                      + N * H * W * x.dtype.itemsize
                      + (2 * K * K + 1) * 4)

    kern = functools.partial(_spatial_attention_kernel, K=K, TOP=TOP)
    out = pl.pallas_call(
        kern,
        out_shape=jax.ShapeDtypeStruct((N, 1, H, W), x.dtype),
        grid=(N, n_c),
        in_specs=[
            pl.BlockSpec((None, c_block, H, W), lambda n, c: (n, c, 0, 0)),
            pl.BlockSpec(memory_space=pltpu.MemorySpace.SMEM),   # conv weights
            pl.BlockSpec(memory_space=pltpu.MemorySpace.SMEM),   # conv bias
        ],
        out_specs=pl.BlockSpec((None, None, H, W), lambda n, c: (n, 0, 0, 0)),
        scratch_shapes=[
            pltpu.VMEM((HPAD, WPAD), jnp.float32),   # padded running channel max
            pltpu.VMEM((HPAD, WPAD), jnp.float32),   # padded running channel sum
        ],
        compiler_params=pltpu.CompilerParams(
            dimension_semantics=("parallel", "arbitrary"),
        ),
        cost_estimate=pl.CostEstimate(
            flops=flops,
            transcendentals=N * H * W,
            bytes_accessed=bytes_accessed,
        ),
    )(x, w_flat, b_flat)          # x passed in its native dtype (no HBM copy)
    return out


# ----------------------------------------------------------------------------
# Demo / self-check
# ----------------------------------------------------------------------------
if __name__ == "__main__":
    key = jax.random.PRNGKey(0)
    k1, k2, k3 = jax.random.split(key, 3)

    N, C, H, W = 2, 4, 16, 16
    K = 7

    x = jax.random.normal(k1, (N, C, H, W), jnp.float32)
    fan_in = 2 * K * K
    weight = jax.random.normal(k2, (1, 2, K, K), jnp.float32) / jnp.sqrt(fan_in)
    bias = 0.1 * jax.random.normal(k3, (1,), jnp.float32)

    fwd = jax.jit(functools.partial(spatial_attention, kernel_size=K, c_block=2))
    out = fwd(x, weight, bias)
    jax.block_until_ready(out)

    # Pure-JAX reference of the PyTorch forward pass.
    mx = jnp.max(x, axis=1, keepdims=True)
    av = jnp.mean(x, axis=1, keepdims=True)
    pooled = jnp.concatenate([mx, av], axis=1)
    ref = lax.conv_general_dilated(
        pooled, weight, window_strides=(1, 1),
        padding=[(K // 2, K // 2), (K // 2, K // 2)],
        dimension_numbers=("NCHW", "OIHW", "NCHW"))
    ref = jax.nn.sigmoid(ref + bias.reshape(1, 1, 1, 1))

    assert out.shape == (N, 1, H, W), out.shape
    assert bool(jnp.all(jnp.isfinite(out)))
    assert jnp.allclose(out, ref, rtol=1e-4, atol=1e-5), float(
        jnp.max(jnp.abs(out - ref)))
    print("KERNEL_OK")
</pallas_src>

<mosaic_0001>
module attributes {stable_mosaic.version = 11 : i64} {
  func.func @_spatial_attention_kernel(%arg0: i32, %arg1: i32, %arg2: memref<1x2x16x16xf32, #tpu.memory_space<vmem>>, %arg3: memref<98xf32, #tpu.memory_space<smem>>, %arg4: memref<1xf32, #tpu.memory_space<smem>>, %arg5: memref<1x1x16x16xf32, #tpu.memory_space<vmem>>, %arg6: memref<32x128xf32, #tpu.memory_space<vmem>>, %arg7: memref<32x128xf32, #tpu.memory_space<vmem>>) attributes {dimension_semantics = [#tpu.dimension_semantics<parallel>, #tpu.dimension_semantics<arbitrary>], iteration_bounds = array<i64: 2, 2>, scalar_prefetch = 0 : i64, scratch_operands = 2 : i64, tpu.core_type = #tpu.core_type<tc>, window_params = [{transform_indices = @transform_0, window_bounds = array<i64: 1, 2, 16, 16>}, {transform_indices = @transform_1, window_bounds = array<i64: 98>}, {transform_indices = @transform_2, window_bounds = array<i64: 1>}, {transform_indices = @transform_3, window_bounds = array<i64: 1, 1, 16, 16>}]} {
    %c0 = arith.constant 0 : index
    %c0_0 = arith.constant 0 : index
    %c0_1 = arith.constant 0 : index
    %c0_2 = arith.constant 0 : index
    %0 = vector.load %arg2[%c0, %c0_0, %c0_1, %c0_2] : memref<1x2x16x16xf32, #tpu.memory_space<vmem>>, vector<1x2x16x16xf32>
    %1 = vector.shape_cast %0 : vector<1x2x16x16xf32> to vector<2x16x16xf32>
    %cst = arith.constant dense<0xFF800000> : vector<16x16xf32>
    %2 = vector.multi_reduction <maximumf>, %1, %cst [0] : vector<2x16x16xf32> to vector<16x16xf32>
    %cst_3 = arith.constant dense<0.000000e+00> : vector<16x16xf32>
    %3 = vector.multi_reduction <add>, %1, %cst_3 [0] : vector<2x16x16xf32> to vector<16x16xf32>
    %c0_i32 = arith.constant 0 : i32
    %4 = arith.cmpi eq, %arg1, %c0_i32 : i32
    %5 = arith.extui %4 : i1 to i32
    %c0_i32_4 = arith.constant 0 : i32
    %6 = arith.cmpi ne, %5, %c0_i32_4 : i32
    scf.if %6 {
      %cst_8 = arith.constant 0.000000e+00 : f32
      %13 = vector.broadcast %cst_8 : f32 to vector<32x128xf32>
      %c0_9 = arith.constant 0 : index
      %c0_10 = arith.constant 0 : index
      %14 = vector.load %arg6[%c0_9, %c0_10] : memref<32x128xf32, #tpu.memory_space<vmem>>, vector<32x128xf32>
      tpu.vector_store %arg6[%c0_9, %c0_10], %13 {strides = array<i32>} : memref<32x128xf32, #tpu.memory_space<vmem>>, vector<32x128xf32>,
      %cst_11 = arith.constant 0.000000e+00 : f32
      %15 = vector.broadcast %cst_11 : f32 to vector<32x128xf32>
      %c0_12 = arith.constant 0 : index
      %c0_13 = arith.constant 0 : index
      %16 = vector.load %arg7[%c0_12, %c0_13] : memref<32x128xf32, #tpu.memory_space<vmem>>, vector<32x128xf32>
      tpu.vector_store %arg7[%c0_12, %c0_13], %15 {strides = array<i32>} : memref<32x128xf32, #tpu.memory_space<vmem>>, vector<32x128xf32>,
      %c8 = arith.constant 8 : index
      %c0_14 = arith.constant 0 : index
      %17 = vector.load %arg6[%c8, %c0_14] : memref<32x128xf32, #tpu.memory_space<vmem>>, vector<16x16xf32>
      tpu.vector_store %arg6[%c8, %c0_14], %2 {strides = array<i32>} : memref<32x128xf32, #tpu.memory_space<vmem>>, vector<16x16xf32>,
      %c8_15 = arith.constant 8 : index
      %c0_16 = arith.constant 0 : index
      %18 = vector.load %arg7[%c8_15, %c0_16] : memref<32x128xf32, #tpu.memory_space<vmem>>, vector<16x16xf32>
      tpu.vector_store %arg7[%c8_15, %c0_16], %3 {strides = array<i32>} : memref<32x128xf32, #tpu.memory_space<vmem>>, vector<16x16xf32>,
    } else {
    }
    %c0_i32_5 = arith.constant 0 : i32
    %7 = arith.cmpi sgt, %arg1, %c0_i32_5 : i32
    %8 = arith.extui %7 : i1 to i32
    %c0_i32_6 = arith.constant 0 : i32
    %9 = arith.cmpi ne, %8, %c0_i32_6 : i32
    scf.if %9 {
      %c8 = arith.constant 8 : index
      %c0_8 = arith.constant 0 : index
      %13 = vector.load %arg6[%c8, %c0_8] : memref<32x128xf32, #tpu.memory_space<vmem>>, vector<16x16xf32>
      %14 = arith.maximumf %13, %2 : vector<16x16xf32>
      %c8_9 = arith.constant 8 : index
      %c0_10 = arith.constant 0 : index
      %15 = vector.load %arg6[%c8_9, %c0_10] : memref<32x128xf32, #tpu.memory_space<vmem>>, vector<16x16xf32>
      tpu.vector_store %arg6[%c8_9, %c0_10], %14 {strides = array<i32>} : memref<32x128xf32, #tpu.memory_space<vmem>>, vector<16x16xf32>,
      %c8_11 = arith.constant 8 : index
      %c0_12 = arith.constant 0 : index
      %16 = vector.load %arg7[%c8_11, %c0_12] : memref<32x128xf32, #tpu.memory_space<vmem>>, vector<16x16xf32>
      %17 = arith.addf %16, %3 : vector<16x16xf32>
      %c8_13 = arith.constant 8 : index
      %c0_14 = arith.constant 0 : index
      %18 = vector.load %arg7[%c8_13, %c0_14] : memref<32x128xf32, #tpu.memory_space<vmem>>, vector<16x16xf32>
      tpu.vector_store %arg7[%c8_13, %c0_14], %17 {strides = array<i32>} : memref<32x128xf32, #tpu.memory_space<vmem>>, vector<16x16xf32>,
    } else {
    }
    %c1_i32 = arith.constant 1 : i32
    %10 = arith.cmpi eq, %arg1, %c1_i32 : i32
    %11 = arith.extui %10 : i1 to i32
    %c0_i32_7 = arith.constant 0 : i32
    %12 = arith.cmpi ne, %11, %c0_i32_7 : i32
    scf.if %12 {
      %c0_8 = arith.constant 0 : index
      %c0_9 = arith.constant 0 : index
      %13 = vector.load %arg6[%c0_8, %c0_9] : memref<32x128xf32, #tpu.memory_space<vmem>>, vector<32x128xf32>
      %c0_10 = arith.constant 0 : index
      %c0_11 = arith.constant 0 : index
      %14 = vector.load %arg7[%c0_10, %c0_11] : memref<32x128xf32, #tpu.memory_space<vmem>>, vector<32x128xf32>
      %cst_12 = arith.constant 0.000000e+00 : f32
      %15 = vector.broadcast %cst_12 : f32 to vector<16x16xf32>
      %cst_13 = arith.constant 0.000000e+00 : f32
      %16 = vector.broadcast %cst_13 : f32 to vector<16x16xf32>
      %cst_14 = arith.constant 0.000000e+00 : f32
      %17 = vector.broadcast %cst_14 : f32 to vector<16x16xf32>
      %cst_15 = arith.constant 0.000000e+00 : f32
      %18 = vector.broadcast %cst_15 : f32 to vector<16x16xf32>
      %c3_i32 = arith.constant 3 : i32
      %19 = tpu.dynamic_rotate %13 by %c3_i32 dim 1 : vector<32x128xf32>, i32 -> vector<32x128xf32>
      %c3_i32_16 = arith.constant 3 : i32
      %20 = tpu.dynamic_rotate %14 by %c3_i32_16 dim 1 : vector<32x128xf32>, i32 -> vector<32x128xf32>
      %c0_17 = arith.constant 0 : index
      %21 = memref.load %arg3[%c0_17] : memref<98xf32, #tpu.memory_space<smem>>
      %c49 = arith.constant 49 : index
      %22 = memref.load %arg3[%c49] : memref<98xf32, #tpu.memory_space<smem>>
      %23 = vector.extract_strided_slice %19 {offsets = [5, 0], sizes = [16, 16], strides = [1, 1]} : vector<32x128xf32> to vector<16x16xf32>
      %24 = vector.broadcast %21 : f32 to vector<16x16xf32>
      %25 = arith.mulf %24, %23 : vector<16x16xf32>
      %26 = arith.addf %15, %25 : vector<16x16xf32>
      %27 = vector.extract_strided_slice %20 {offsets = [5, 0], sizes = [16, 16], strides = [1, 1]} : vector<32x128xf32> to vector<16x16xf32>
      %28 = vector.broadcast %22 : f32 to vector<16x16xf32>
      %29 = arith.mulf %28, %27 : vector<16x16xf32>
      %30 = arith.addf %16, %29 : vector<16x16xf32>
      %c7 = arith.constant 7 : index
      %31 = memref.load %arg3[%c7] : memref<98xf32, #tpu.memory_space<smem>>
      %c56 = arith.constant 56 : index
      %32 = memref.load %arg3[%c56] : memref<98xf32, #tpu.memory_space<smem>>
      %33 = vector.extract_strided_slice %19 {offsets = [6, 0], sizes = [16, 16], strides = [1, 1]} : vector<32x128xf32> to vector<16x16xf32>
      %34 = vector.broadcast %31 : f32 to vector<16x16xf32>
      %35 = arith.mulf %34, %33 : vector<16x16xf32>
      %36 = arith.addf %17, %35 : vector<16x16xf32>
      %37 = vector.extract_strided_slice %20 {offsets = [6, 0], sizes = [16, 16], strides = [1, 1]} : vector<32x128xf32> to vector<16x16xf32>
      %38 = vector.broadcast %32 : f32 to vector<16x16xf32>
      %39 = arith.mulf %38, %37 : vector<16x16xf32>
      %40 = arith.addf %18, %39 : vector<16x16xf32>
      %c14 = arith.constant 14 : index
      %41 = memref.load %arg3[%c14] : memref<98xf32, #tpu.memory_space<smem>>
      %c63 = arith.constant 63 : index
      %42 = memref.load %arg3[%c63] : memref<98xf32, #tpu.memory_space<smem>>
      %43 = vector.extract_strided_slice %19 {offsets = [7, 0], sizes = [16, 16], strides = [1, 1]} : vector<32x128xf32> to vector<16x16xf32>
      %44 = vector.broadcast %41 : f32 to vector<16x16xf32>
      %45 = arith.mulf %44, %43 : vector<16x16xf32>
      %46 = arith.addf %26, %45 : vector<16x16xf32>
      %47 = vector.extract_strided_slice %20 {offsets = [7, 0], sizes = [16, 16], strides = [1, 1]} : vector<32x128xf32> to vector<16x16xf32>
      %48 = vector.broadcast %42 : f32 to vector<16x16xf32>
      %49 = arith.mulf %48, %47 : vector<16x16xf32>
      %50 = arith.addf %30, %49 : vector<16x16xf32>
      %c21 = arith.constant 21 : index
      %51 = memref.load %arg3[%c21] : memref<98xf32, #tpu.memory_space<smem>>
      %c70 = arith.constant 70 : index
      %52 = memref.load %arg3[%c70] : memref<98xf32, #tpu.memory_space<smem>>
      %53 = vector.extract_strided_slice %19 {offsets = [8, 0], sizes = [16, 16], strides = [1, 1]} : vector<32x128xf32> to vector<16x16xf32>
      %54 = vector.broadcast %51 : f32 to vector<16x16xf32>
      %55 = arith.mulf %54, %53 : vector<16x16xf32>
      %56 = arith.addf %36, %55 : vector<16x16xf32>
      %57 = vector.extract_strided_slice %20 {offsets = [8, 0], sizes = [16, 16], strides = [1, 1]} : vector<32x128xf32> to vector<16x16xf32>
      %58 = vector.broadcast %52 : f32 to vector<16x16xf32>
      %59 = arith.mulf %58, %57 : vector<16x16xf32>
      %60 = arith.addf %40, %59 : vector<16x16xf32>
      %c28 = arith.constant 28 : index
      %61 = memref.load %arg3[%c28] : memref<98xf32, #tpu.memory_space<smem>>
      %c77 = arith.constant 77 : index
      %62 = memref.load %arg3[%c77] : memref<98xf32, #tpu.memory_space<smem>>
      %63 = vector.extract_strided_slice %19 {offsets = [9, 0], sizes = [16, 16], strides = [1, 1]} : vector<32x128xf32> to vector<16x16xf32>
      %64 = vector.broadcast %61 : f32 to vector<16x16xf32>
      %65 = arith.mulf %64, %63 : vector<16x16xf32>
      %66 = arith.addf %46, %65 : vector<16x16xf32>
      %67 = vector.extract_strided_slice %20 {offsets = [9, 0], sizes = [16, 16], strides = [1, 1]} : vector<32x128xf32> to vector<16x16xf32>
      %68 = vector.broadcast %62 : f32 to vector<16x16xf32>
      %69 = arith.mulf %68, %67 : vector<16x16xf32>
      %70 = arith.addf %50, %69 : vector<16x16xf32>
      %c35 = arith.constant 35 : index
      %71 = memref.load %arg3[%c35] : memref<98xf32, #tpu.memory_space<smem>>
      %c84 = arith.constant 84 : index
      %72 = memref.load %arg3[%c84] : memref<98xf32, #tpu.memory_space<smem>>
      %73 = vector.extract_strided_slice %19 {offsets = [10, 0], sizes = [16, 16], strides = [1, 1]} : vector<32x128xf32> to vector<16x16xf32>
      %74 = vector.broadcast %71 : f32 to vector<16x16xf32>
      %75 = arith.mulf %74, %73 : vector<16x16xf32>
      %76 = arith.addf %56, %75 : vector<16x16xf32>
      %77 = vector.extract_strided_slice %20 {offsets = [10, 0], sizes = [16, 16], strides = [1, 1]} : vector<32x128xf32> to vector<16x16xf32>
      %78 = vector.broadcast %72 : f32 to vector<16x16xf32>
      %79 = arith.mulf %78, %77 : vector<16x16xf32>
      %80 = arith.addf %60, %79 : vector<16x16xf32>
      %c42 = arith.constant 42 : index
      %81 = memref.load %arg3[%c42] : memref<98xf32, #tpu.memory_space<smem>>
      %c91 = arith.constant 91 : index
      %82 = memref.load %arg3[%c91] : memref<98xf32, #tpu.memory_space<smem>>
      %83 = vector.extract_strided_slice %19 {offsets = [11, 0], sizes = [16, 16], strides = [1, 1]} : vector<32x128xf32> to vector<16x16xf32>
      %84 = vector.broadcast %81 : f32 to vector<16x16xf32>
      %85 = arith.mulf %84, %83 : vector<16x16xf32>
      %86 = arith.addf %66, %85 : vector<16x16xf32>
      %87 = vector.extract_strided_slice %20 {offsets = [11, 0], sizes = [16, 16], strides = [1, 1]} : vector<32x128xf32> to vector<16x16xf32>
      %88 = vector.broadcast %82 : f32 to vector<16x16xf32>
      %89 = arith.mulf %88, %87 : vector<16x16xf32>
      %90 = arith.addf %70, %89 : vector<16x16xf32>
      %c2_i32 = arith.constant 2 : i32
      %91 = tpu.dynamic_rotate %13 by %c2_i32 dim 1 : vector<32x128xf32>, i32 -> vector<32x128xf32>
      %c2_i32_18 = arith.constant 2 : i32
      %92 = tpu.dynamic_rotate %14 by %c2_i32_18 dim 1 : vector<32x128xf32>, i32 -> vector<32x128xf32>
      %c1 = arith.constant 1 : index
      %93 = memref.load %arg3[%c1] : memref<98xf32, #tpu.memory_space<smem>>
      %c50 = arith.constant 50 : index
      %94 = memref.load %arg3[%c50] : memref<98xf32, #tpu.memory_space<smem>>
      %95 = vector.extract_strided_slice %91 {offsets = [5, 0], sizes = [16, 16], strides = [1, 1]} : vector<32x128xf32> to vector<16x16xf32>
      %96 = vector.broadcast %93 : f32 to vector<16x16xf32>
      %97 = arith.mulf %96, %95 : vector<16x16xf32>
      %98 = arith.addf %76, %97 : vector<16x16xf32>
      %99 = vector.extract_strided_slice %92 {offsets = [5, 0], sizes = [16, 16], strides = [1, 1]} : vector<32x128xf32> to vector<16x16xf32>
      %100 = vector.broadcast %94 : f32 to vector<16x16xf32>
      %101 = arith.mulf %100, %99 : vector<16x16xf32>
      %102 = arith.addf %80, %101 : vector<16x16xf32>
      %c8 = arith.constant 8 : index
      %103 = memref.load %arg3[%c8] : memref<98xf32, #tpu.memory_space<smem>>
      %c57 = arith.constant 57 : index
      %104 = memref.load %arg3[%c57] : memref<98xf32, #tpu.memory_space<smem>>
      %105 = vector.extract_strided_slice %91 {offsets = [6, 0], sizes = [16, 16], strides = [1, 1]} : vector<32x128xf32> to vector<16x16xf32>
      %106 = vector.broadcast %103 : f32 to vector<16x16xf32>
      %107 = arith.mulf %106, %105 : vector<16x16xf32>
      %108 = arith.addf %86, %107 : vector<16x16xf32>
      %109 = vector.extract_strided_slice %92 {offsets = [6, 0], sizes = [16, 16], strides = [1, 1]} : vector<32x128xf32> to vector<16x16xf32>
      %110 = vector.broadcast %104 : f32 to vector<16x16xf32>
      %111 = arith.mulf %110, %109 : vector<16x16xf32>
      %112 = arith.addf %90, %111 : vector<16x16xf32>
      %c15 = arith.constant 15 : index
      %113 = memref.load %arg3[%c15] : memref<98xf32, #tpu.memory_space<smem>>
      %c64 = arith.constant 64 : index
      %114 = memref.load %arg3[%c64] : memref<98xf32, #tpu.memory_space<smem>>
      %115 = vector.extract_strided_slice %91 {offsets = [7, 0], sizes = [16, 16], strides = [1, 1]} : vector<32x128xf32> to vector<16x16xf32>
      %116 = vector.broadcast %113 : f32 to vector<16x16xf32>
      %117 = arith.mulf %116, %115 : vector<16x16xf32>
      %118 = arith.addf %98, %117 : vector<16x16xf32>
      %119 = vector.extract_strided_slice %92 {offsets = [7, 0], sizes = [16, 16], strides = [1, 1]} : vector<32x128xf32> to vector<16x16xf32>
      %120 = vector.broadcast %114 : f32 to vector<16x16xf32>
      %121 = arith.mulf %120, %119 : vector<16x16xf32>
      %122 = arith.addf %102, %121 : vector<16x16xf32>
      %c22 = arith.constant 22 : index
      %123 = memref.load %arg3[%c22] : memref<98xf32, #tpu.memory_space<smem>>
      %c71 = arith.constant 71 : index
      %124 = memref.load %arg3[%c71] : memref<98xf32, #tpu.memory_space<smem>>
      %125 = vector.extract_strided_slice %91 {offsets = [8, 0], sizes = [16, 16], strides = [1, 1]} : vector<32x128xf32> to vector<16x16xf32>
      %126 = vector.broadcast %123 : f32 to vector<16x16xf32>
      %127 = arith.mulf %126, %125 : vector<16x16xf32>
      %128 = arith.addf %108, %127 : vector<16x16xf32>
      %129 = vector.extract_strided_slice %92 {offsets = [8, 0], sizes = [16, 16], strides = [1, 1]} : vector<32x128xf32> to vector<16x16xf32>
      %130 = vector.broadcast %124 : f32 to vector<16x16xf32>
      %131 = arith.mulf %130, %129 : vector<16x16xf32>
      %132 = arith.addf %112, %131 : vector<16x16xf32>
      %c29 = arith.constant 29 : index
      %133 = memref.load %arg3[%c29] : memref<98xf32, #tpu.memory_space<smem>>
      %c78 = arith.constant 78 : index
      %134 = memref.load %arg3[%c78] : memref<98xf32, #tpu.memory_space<smem>>
      %135 = vector.extract_strided_slice %91 {offsets = [9, 0], sizes = [16, 16], strides = [1, 1]} : vector<32x128xf32> to vector<16x16xf32>
      %136 = vector.broadcast %133 : f32 to vector<16x16xf32>
      %137 = arith.mulf %136, %135 : vector<16x16xf32>
      %138 = arith.addf %118, %137 : vector<16x16xf32>
      %139 = vector.extract_strided_slice %92 {offsets = [9, 0], sizes = [16, 16], strides = [1, 1]} : vector<32x128xf32> to vector<16x16xf32>
      %140 = vector.broadcast %134 : f32 to vector<16x16xf32>
      %141 = arith.mulf %140, %139 : vector<16x16xf32>
      %142 = arith.addf %122, %141 : vector<16x16xf32>
      %c36 = arith.constant 36 : index
      %143 = memref.load %arg3[%c36] : memref<98xf32, #tpu.memory_space<smem>>
      %c85 = arith.constant 85 : index
      %144 = memref.load %arg3[%c85] : memref<98xf32, #tpu.memory_space<smem>>
      %145 = vector.extract_strided_slice %91 {offsets = [10, 0], sizes = [16, 16], strides = [1, 1]} : vector<32x128xf32> to vector<16x16xf32>
      %146 = vector.broadcast %143 : f32 to vector<16x16xf32>
      %147 = arith.mulf %146, %145 : vector<16x16xf32>
      %148 = arith.addf %128, %147 : vector<16x16xf32>
      %149 = vector.extract_strided_slice %92 {offsets = [10, 0], sizes = [16, 16], strides = [1, 1]} : vector<32x128xf32> to vector<16x16xf32>
      %150 = vector.broadcast %144 : f32 to vector<16x16xf32>
      %151 = arith.mulf %150, %149 : vector<16x16xf32>
      %152 = arith.addf %132, %151 : vector<16x16xf32>
      %c43 = arith.constant 43 : index
      %153 = memref.load %arg3[%c43] : memref<98xf32, #tpu.memory_space<smem>>
      %c92 = arith.constant 92 : index
      %154 = memref.load %arg3[%c92] : memref<98xf32, #tpu.memory_space<smem>>
      %155 = vector.extract_strided_slice %91 {offsets = [11, 0], sizes = [16, 16], strides = [1, 1]} : vector<32x128xf32> to vector<16x16xf32>
      %156 = vector.broadcast %153 : f32 to vector<16x16xf32>
      %157 = arith.mulf %156, %155 : vector<16x16xf32>
      %158 = arith.addf %138, %157 : vector<16x16xf32>
      %159 = vector.extract_strided_slice %92 {offsets = [11, 0], sizes = [16, 16], strides = [1, 1]} : vector<32x128xf32> to vector<16x16xf32>
      %160 = vector.broadcast %154 : f32 to vector<16x16xf32>
      %161 = arith.mulf %160, %159 : vector<16x16xf32>
      %162 = arith.addf %142, %161 : vector<16x16xf32>
      %c1_i32_19 = arith.constant 1 : i32
      %163 = tpu.dynamic_rotate %13 by %c1_i32_19 dim 1 : vector<32x128xf32>, i32 -> vector<32x128xf32>
      %c1_i32_20 = arith.constant 1 : i32
      %164 = tpu.dynamic_rotate %14 by %c1_i32_20 dim 1 : vector<32x128xf32>, i32 -> vector<32x128xf32>
      %c2 = arith.constant 2 : index
      %165 = memref.load %arg3[%c2] : memref<98xf32, #tpu.memory_space<smem>>
      %c51 = arith.constant 51 : index
      %166 = memref.load %arg3[%c51] : memref<98xf32, #tpu.memory_space<smem>>
      %167 = vector.extract_strided_slice %163 {offsets = [5, 0], sizes = [16, 16], strides = [1, 1]} : vector<32x128xf32> to vector<16x16xf32>
      %168 = vector.broadcast %165 : f32 to vector<16x16xf32>
      %169 = arith.mulf %168, %167 : vector<16x16xf32>
      %170 = arith.addf %148, %169 : vector<16x16xf32>
      %171 = vector.extract_strided_slice %164 {offsets = [5, 0], sizes = [16, 16], strides = [1, 1]} : vector<32x128xf32> to vector<16x16xf32>
      %172 = vector.broadcast %166 : f32 to vector<16x16xf32>
      %173 = arith.mulf %172, %171 : vector<16x16xf32>
      %174 = arith.addf %152, %173 : vector<16x16xf32>
      %c9 = arith.constant 9 : index
      %175 = memref.load %arg3[%c9] : memref<98xf32, #tpu.memory_space<smem>>
      %c58 = arith.constant 58 : index
      %176 = memref.load %arg3[%c58] : memref<98xf32, #tpu.memory_space<smem>>
      %177 = vector.extract_strided_slice %163 {offsets = [6, 0], sizes = [16, 16], strides = [1, 1]} : vector<32x128xf32> to vector<16x16xf32>
      %178 = vector.broadcast %175 : f32 to vector<16x16xf32>
      %179 = arith.mulf %178, %177 : vector<16x16xf32>
      %180 = arith.addf %158, %179 : vector<16x16xf32>
      %181 = vector.extract_strided_slice %164 {offsets = [6, 0], sizes = [16, 16], strides = [1, 1]} : vector<32x128xf32> to vector<16x16xf32>
      %182 = vector.broadcast %176 : f32 to vector<16x16xf32>
      %183 = arith.mulf %182, %181 : vector<16x16xf32>
      %184 = arith.addf %162, %183 : vector<16x16xf32>
      %c16 = arith.constant 16 : index
      %185 = memref.load %arg3[%c16] : memref<98xf32, #tpu.memory_space<smem>>
      %c65 = arith.constant 65 : index
      %186 = memref.load %arg3[%c65] : memref<98xf32, #tpu.memory_space<smem>>
      %187 = vector.extract_strided_slice %163 {offsets = [7, 0], sizes = [16, 16], strides = [1, 1]} : vector<32x128xf32> to vector<16x16xf32>
      %188 = vector.broadcast %185 : f32 to vector<16x16xf32>
      %189 = arith.mulf %188, %187 : vector<16x16xf32>
      %190 = arith.addf %170, %189 : vector<16x16xf32>
      %191 = vector.extract_strided_slice %164 {offsets = [7, 0], sizes = [16, 16], strides = [1, 1]} : vector<32x128xf32> to vector<16x16xf32>
      %192 = vector.broadcast %186 : f32 to vector<16x16xf32>
      %193 = arith.mulf %192, %191 : vector<16x16xf32>
      %194 = arith.addf %174, %193 : vector<16x16xf32>
      %c23 = arith.constant 23 : index
      %195 = memref.load %arg3[%c23] : memref<98xf32, #tpu.memory_space<smem>>
      %c72 = arith.constant 72 : index
      %196 = memref.load %arg3[%c72] : memref<98xf32, #tpu.memory_space<smem>>
      %197 = vector.extract_strided_slice %163 {offsets = [8, 0], sizes = [16, 16], strides = [1, 1]} : vector<32x128xf32> to vector<16x16xf32>
      %198 = vector.broadcast %195 : f32 to vector<16x16xf32>
      %199 = arith.mulf %198, %197 : vector<16x16xf32>
      %200 = arith.addf %180, %199 : vector<16x16xf32>
      %201 = vector.extract_strided_slice %164 {offsets = [8, 0], sizes = [16, 16], strides = [1, 1]} : vector<32x128xf32> to vector<16x16xf32>
      %202 = vector.broadcast %196 : f32 to vector<16x16xf32>
      %203 = arith.mulf %202, %201 : vector<16x16xf32>
      %204 = arith.addf %184, %203 : vector<16x16xf32>
      %c30 = arith.constant 30 : index
      %205 = memref.load %arg3[%c30] : memref<98xf32, #tpu.memory_space<smem>>
      %c79 = arith.constant 79 : index
      %206 = memref.load %arg3[%c79] : memref<98xf32, #tpu.memory_space<smem>>
      %207 = vector.extract_strided_slice %163 {offsets = [9, 0], sizes = [16, 16], strides = [1, 1]} : vector<32x128xf32> to vector<16x16xf32>
      %208 = vector.broadcast %205 : f32 to vector<16x16xf32>
      %209 = arith.mulf %208, %207 : vector<16x16xf32>
      %210 = arith.addf %190, %209 : vector<16x16xf32>
      %211 = vector.extract_strided_slice %164 {offsets = [9, 0], sizes = [16, 16], strides = [1, 1]} : vector<32x128xf32> to vector<16x16xf32>
      %212 = vector.broadcast %206 : f32 to vector<16x16xf32>
      %213 = arith.mulf %212, %211 : vector<16x16xf32>
      %214 = arith.addf %194, %213 : vector<16x16xf32>
      %c37 = arith.constant 37 : index
      %215 = memref.load %arg3[%c37] : memref<98xf32, #tpu.memory_space<smem>>
      %c86 = arith.constant 86 : index
      %216 = memref.load %arg3[%c86] : memref<98xf32, #tpu.memory_space<smem>>
      %217 = vector.extract_strided_slice %163 {offsets = [10, 0], sizes = [16, 16], strides = [1, 1]} : vector<32x128xf32> to vector<16x16xf32>
      %218 = vector.broadcast %215 : f32 to vector<16x16xf32>
      %219 = arith.mulf %218, %217 : vector<16x16xf32>
      %220 = arith.addf %200, %219 : vector<16x16xf32>
      %221 = vector.extract_strided_slice %164 {offsets = [10, 0], sizes = [16, 16], strides = [1, 1]} : vector<32x128xf32> to vector<16x16xf32>
      %222 = vector.broadcast %216 : f32 to vector<16x16xf32>
      %223 = arith.mulf %222, %221 : vector<16x16xf32>
      %224 = arith.addf %204, %223 : vector<16x16xf32>
      %c44 = arith.constant 44 : index
      %225 = memref.load %arg3[%c44] : memref<98xf32, #tpu.memory_space<smem>>
      %c93 = arith.constant 93 : index
      %226 = memref.load %arg3[%c93] : memref<98xf32, #tpu.memory_space<smem>>
      %227 = vector.extract_strided_slice %163 {offsets = [11, 0], sizes = [16, 16], strides = [1, 1]} : vector<32x128xf32> to vector<16x16xf32>
      %228 = vector.broadcast %225 : f32 to vector<16x16xf32>
      %229 = arith.mulf %228, %227 : vector<16x16xf32>
      %230 = arith.addf %210, %229 : vector<16x16xf32>
      %231 = vector.extract_strided_slice %164 {offsets = [11, 0], sizes = [16, 16], strides = [1, 1]} : vector<32x128xf32> to vector<16x16xf32>
      %232 = vector.broadcast %226 : f32 to vector<16x16xf32>
      %233 = arith.mulf %232, %231 : vector<16x16xf32>
      %234 = arith.addf %214, %233 : vector<16x16xf32>
      %c0_i32_21 = arith.constant 0 : i32
      %235 = tpu.dynamic_rotate %13 by %c0_i32_21 dim 1 : vector<32x128xf32>, i32 -> vector<32x128xf32>
      %c0_i32_22 = arith.constant 0 : i32
      %236 = tpu.dynamic_rotate %14 by %c0_i32_22 dim 1 : vector<32x128xf32>, i32 -> vector<32x128xf32>
      %c3 = arith.constant 3 : index
      %237 = memref.load %arg3[%c3] : memref<98xf32, #tpu.memory_space<smem>>
      %c52 = arith.constant 52 : index
      %238 = memref.load %arg3[%c52] : memref<98xf32, #tpu.memory_space<smem>>
      %239 = vector.extract_strided_slice %235 {offsets = [5, 0], sizes = [16, 16], strides = [1, 1]} : vector<32x128xf32> to vector<16x16xf32>
      %240 = vector.broadcast %237 : f32 to vector<16x16xf32>
      %241 = arith.mulf %240, %239 : vector<16x16xf32>
      %242 = arith.addf %220, %241 : vector<16x16xf32>
      %243 = vector.extract_strided_slice %236 {offsets = [5, 0], sizes = [16, 16], strides = [1, 1]} : vector<32x128xf32> to vector<16x16xf32>
      %244 = vector.broadcast %238 : f32 to vector<16x16xf32>
      %245 = arith.mulf %244, %243 : vector<16x16xf32>
      %246 = arith.addf %224, %245 : vector<16x16xf32>
      %c10 = arith.constant 10 : index
      %247 = memref.load %arg3[%c10] : memref<98xf32, #tpu.memory_space<smem>>
      %c59 = arith.constant 59 : index
      %248 = memref.load %arg3[%c59] : memref<98xf32, #tpu.memory_space<smem>>
      %249 = vector.extract_strided_slice %235 {offsets = [6, 0], sizes = [16, 16], strides = [1, 1]} : vector<32x128xf32> to vector<16x16xf32>
      %250 = vector.broadcast %247 : f32 to vector<16x16xf32>
      %251 = arith.mulf %250, %249 : vector<16x16xf32>
      %252 = arith.addf %230, %251 : vector<16x16xf32>
      %253 = vector.extract_strided_slice %236 {offsets = [6, 0], sizes = [16, 16], strides = [1, 1]} : vector<32x128xf32> to vector<16x16xf32>
      %254 = vector.broadcast %248 : f32 to vector<16x16xf32>
      %255 = arith.mulf %254, %253 : vector<16x16xf32>
      %256 = arith.addf %234, %255 : vector<16x16xf32>
      %c17 = arith.constant 17 : index
      %257 = memref.load %arg3[%c17] : memref<98xf32, #tpu.memory_space<smem>>
      %c66 = arith.constant 66 : index
      %258 = memref.load %arg3[%c66] : memref<98xf32, #tpu.memory_space<smem>>
      %259 = vector.extract_strided_slice %235 {offsets = [7, 0], sizes = [16, 16], strides = [1, 1]} : vector<32x128xf32> to vector<16x16xf32>
      %260 = vector.broadcast %257 : f32 to vector<16x16xf32>
      %261 = arith.mulf %260, %259 : vector<16x16xf32>
      %262 = arith.addf %242, %261 : vector<16x16xf32>
      %263 = vector.extract_strided_slice %236 {offsets = [7, 0], sizes = [16, 16], strides = [1, 1]} : vector<32x128xf32> to vector<16x16xf32>
      %264 = vector.broadcast %258 : f32 to vector<16x16xf32>
      %265 = arith.mulf %264, %263 : vector<16x16xf32>
      %266 = arith.addf %246, %265 : vector<16x16xf32>
      %c24 = arith.constant 24 : index
      %267 = memref.load %arg3[%c24] : memref<98xf32, #tpu.memory_space<smem>>
      %c73 = arith.constant 73 : index
      %268 = memref.load %arg3[%c73] : memref<98xf32, #tpu.memory_space<smem>>
      %269 = vector.extract_strided_slice %235 {offsets = [8, 0], sizes = [16, 16], strides = [1, 1]} : vector<32x128xf32> to vector<16x16xf32>
      %270 = vector.broadcast %267 : f32 to vector<16x16xf32>
      %271 = arith.mulf %270, %269 : vector<16x16xf32>
      %272 = arith.addf %252, %271 : vector<16x16xf32>
      %273 = vector.extract_strided_slice %236 {offsets = [8, 0], sizes = [16, 16], strides = [1, 1]} : vector<32x128xf32> to vector<16x16xf32>
      %274 = vector.broadcast %268 : f32 to vector<16x16xf32>
      %275 = arith.mulf %274, %273 : vector<16x16xf32>
      %276 = arith.addf %256, %275 : vector<16x16xf32>
      %c31 = arith.constant 31 : index
      %277 = memref.load %arg3[%c31] : memref<98xf32, #tpu.memory_space<smem>>
      %c80 = arith.constant 80 : index
      %278 = memref.load %arg3[%c80] : memref<98xf32, #tpu.memory_space<smem>>
      %279 = vector.extract_strided_slice %235 {offsets = [9, 0], sizes = [16, 16], strides = [1, 1]} : vector<32x128xf32> to vector<16x16xf32>
      %280 = vector.broadcast %277 : f32 to vector<16x16xf32>
      %281 = arith.mulf %280, %279 : vector<16x16xf32>
      %282 = arith.addf %262, %281 : vector<16x16xf32>
      %283 = vector.extract_strided_slice %236 {offsets = [9, 0], sizes = [16, 16], strides = [1, 1]} : vector<32x128xf32> to vector<16x16xf32>
      %284 = vector.broadcast %278 : f32 to vector<16x16xf32>
      %285 = arith.mulf %284, %283 : vector<16x16xf32>
      %286 = arith.addf %266, %285 : vector<16x16xf32>
      %c38 = arith.constant 38 : index
      %287 = memref.load %arg3[%c38] : memref<98xf32, #tpu.memory_space<smem>>
      %c87 = arith.constant 87 : index
      %288 = memref.load %arg3[%c87] : memref<98xf32, #tpu.memory_space<smem>>
      %289 = vector.extract_strided_slice %235 {offsets = [10, 0], sizes = [16, 16], strides = [1, 1]} : vector<32x128xf32> to vector<16x16xf32>
      %290 = vector.broadcast %287 : f32 to vector<16x16xf32>
      %291 = arith.mulf %290, %289 : vector<16x16xf32>
      %292 = arith.addf %272, %291 : vector<16x16xf32>
      %293 = vector.extract_strided_slice %236 {offsets = [10, 0], sizes = [16, 16], strides = [1, 1]} : vector<32x128xf32> to vector<16x16xf32>
      %294 = vector.broadcast %288 : f32 to vector<16x16xf32>
      %295 = arith.mulf %294, %293 : vector<16x16xf32>
      %296 = arith.addf %276, %295 : vector<16x16xf32>
      %c45 = arith.constant 45 : index
      %297 = memref.load %arg3[%c45] : memref<98xf32, #tpu.memory_space<smem>>
      %c94 = arith.constant 94 : index
      %298 = memref.load %arg3[%c94] : memref<98xf32, #tpu.memory_space<smem>>
      %299 = vector.extract_strided_slice %235 {offsets = [11, 0], sizes = [16, 16], strides = [1, 1]} : vector<32x128xf32> to vector<16x16xf32>
      %300 = vector.broadcast %297 : f32 to vector<16x16xf32>
      %301 = arith.mulf %300, %299 : vector<16x16xf32>
      %302 = arith.addf %282, %301 : vector<16x16xf32>
      %303 = vector.extract_strided_slice %236 {offsets = [11, 0], sizes = [16, 16], strides = [1, 1]} : vector<32x128xf32> to vector<16x16xf32>
      %304 = vector.broadcast %298 : f32 to vector<16x16xf32>
      %305 = arith.mulf %304, %303 : vector<16x16xf32>
      %306 = arith.addf %286, %305 : vector<16x16xf32>
      %c127_i32 = arith.constant 127 : i32
      %307 = tpu.dynamic_rotate %13 by %c127_i32 dim 1 : vector<32x128xf32>, i32 -> vector<32x128xf32>
      %c127_i32_23 = arith.constant 127 : i32
      %308 = tpu.dynamic_rotate %14 by %c127_i32_23 dim 1 : vector<32x128xf32>, i32 -> vector<32x128xf32>
      %c4 = arith.constant 4 : index
      %309 = memref.load %arg3[%c4] : memref<98xf32, #tpu.memory_space<smem>>
      %c53 = arith.constant 53 : index
      %310 = memref.load %arg3[%c53] : memref<98xf32, #tpu.memory_space<smem>>
      %311 = vector.extract_strided_slice %307 {offsets = [5, 0], sizes = [16, 16], strides = [1, 1]} : vector<32x128xf32> to vector<16x16xf32>
      %312 = vector.broadcast %309 : f32 to vector<16x16xf32>
      %313 = arith.mulf %312, %311 : vector<16x16xf32>
      %314 = arith.addf %292, %313 : vector<16x16xf32>
      %315 = vector.extract_strided_slice %308 {offsets = [5, 0], sizes = [16, 16], strides = [1, 1]} : vector<32x128xf32> to vector<16x16xf32>
      %316 = vector.broadcast %310 : f32 to vector<16x16xf32>
      %317 = arith.mulf %316, %315 : vector<16x16xf32>
      %318 = arith.addf %296, %317 : vector<16x16xf32>
      %c11 = arith.constant 11 : index
      %319 = memref.load %arg3[%c11] : memref<98xf32, #tpu.memory_space<smem>>
      %c60 = arith.constant 60 : index
      %320 = memref.load %arg3[%c60] : memref<98xf32, #tpu.memory_space<smem>>
      %321 = vector.extract_strided_slice %307 {offsets = [6, 0], sizes = [16, 16], strides = [1, 1]} : vector<32x128xf32> to vector<16x16xf32>
      %322 = vector.broadcast %319 : f32 to vector<16x16xf32>
      %323 = arith.mulf %322, %321 : vector<16x16xf32>
      %324 = arith.addf %302, %323 : vector<16x16xf32>
      %325 = vector.extract_strided_slice %308 {offsets = [6, 0], sizes = [16, 16], strides = [1, 1]} : vector<32x128xf32> to vector<16x16xf32>
      %326 = vector.broadcast %320 : f32 to vector<16x16xf32>
      %327 = arith.mulf %326, %325 : vector<16x16xf32>
      %328 = arith.addf %306, %327 : vector<16x16xf32>
      %c18 = arith.constant 18 : index
      %329 = memref.load %arg3[%c18] : memref<98xf32, #tpu.memory_space<smem>>
      %c67 = arith.constant 67 : index
      %330 = memref.load %arg3[%c67] : memref<98xf32, #tpu.memory_space<smem>>
      %331 = vector.extract_strided_slice %307 {offsets = [7, 0], sizes = [16, 16], strides = [1, 1]} : vector<32x128xf32> to vector<16x16xf32>
      %332 = vector.broadcast %329 : f32 to vector<16x16xf32>
      %333 = arith.mulf %332, %331 : vector<16x16xf32>
      %334 = arith.addf %314, %333 : vector<16x16xf32>
      %335 = vector.extract_strided_slice %308 {offsets = [7, 0], sizes = [16, 16], strides = [1, 1]} : vector<32x128xf32> to vector<16x16xf32>
      %336 = vector.broadcast %330 : f32 to vector<16x16xf32>
      %337 = arith.mulf %336, %335 : vector<16x16xf32>
      %338 = arith.addf %318, %337 : vector<16x16xf32>
      %c25 = arith.constant 25 : index
      %339 = memref.load %arg3[%c25] : memref<98xf32, #tpu.memory_space<smem>>
      %c74 = arith.constant 74 : index
      %340 = memref.load %arg3[%c74] : memref<98xf32, #tpu.memory_space<smem>>
      %341 = vector.extract_strided_slice %307 {offsets = [8, 0], sizes = [16, 16], strides = [1, 1]} : vector<32x128xf32> to vector<16x16xf32>
      %342 = vector.broadcast %339 : f32 to vector<16x16xf32>
      %343 = arith.mulf %342, %341 : vector<16x16xf32>
      %344 = arith.addf %324, %343 : vector<16x16xf32>
      %345 = vector.extract_strided_slice %308 {offsets = [8, 0], sizes = [16, 16], strides = [1, 1]} : vector<32x128xf32> to vector<16x16xf32>
      %346 = vector.broadcast %340 : f32 to vector<16x16xf32>
      %347 = arith.mulf %346, %345 : vector<16x16xf32>
      %348 = arith.addf %328, %347 : vector<16x16xf32>
      %c32 = arith.constant 32 : index
      %349 = memref.load %arg3[%c32] : memref<98xf32, #tpu.memory_space<smem>>
      %c81 = arith.constant 81 : index
      %350 = memref.load %arg3[%c81] : memref<98xf32, #tpu.memory_space<smem>>
      %351 = vector.extract_strided_slice %307 {offsets = [9, 0], sizes = [16, 16], strides = [1, 1]} : vector<32x128xf32> to vector<16x16xf32>
      %352 = vector.broadcast %349 : f32 to vector<16x16xf32>
      %353 = arith.mulf %352, %351 : vector<16x16xf32>
      %354 = arith.addf %334, %353 : vector<16x16xf32>
      %355 = vector.extract_strided_slice %308 {offsets = [9, 0], sizes = [16, 16], strides = [1, 1]} : vector<32x128xf32> to vector<16x16xf32>
      %356 = vector.broadcast %350 : f32 to vector<16x16xf32>
      %357 = arith.mulf %356, %355 : vector<16x16xf32>
      %358 = arith.addf %338, %357 : vector<16x16xf32>
      %c39 = arith.constant 39 : index
      %359 = memref.load %arg3[%c39] : memref<98xf32, #tpu.memory_space<smem>>
      %c88 = arith.constant 88 : index
      %360 = memref.load %arg3[%c88] : memref<98xf32, #tpu.memory_space<smem>>
      %361 = vector.extract_strided_slice %307 {offsets = [10, 0], sizes = [16, 16], strides = [1, 1]} : vector<32x128xf32> to vector<16x16xf32>
      %362 = vector.broadcast %359 : f32 to vector<16x16xf32>
      %363 = arith.mulf %362, %361 : vector<16x16xf32>
      %364 = arith.addf %344, %363 : vector<16x16xf32>
      %365 = vector.extract_strided_slice %308 {offsets = [10, 0], sizes = [16, 16], strides = [1, 1]} : vector<32x128xf32> to vector<16x16xf32>
      %366 = vector.broadcast %360 : f32 to vector<16x16xf32>
      %367 = arith.mulf %366, %365 : vector<16x16xf32>
      %368 = arith.addf %348, %367 : vector<16x16xf32>
      %c46 = arith.constant 46 : index
      %369 = memref.load %arg3[%c46] : memref<98xf32, #tpu.memory_space<smem>>
      %c95 = arith.constant 95 : index
      %370 = memref.load %arg3[%c95] : memref<98xf32, #tpu.memory_space<smem>>
      %371 = vector.extract_strided_slice %307 {offsets = [11, 0], sizes = [16, 16], strides = [1, 1]} : vector<32x128xf32> to vector<16x16xf32>
      %372 = vector.broadcast %369 : f32 to vector<16x16xf32>
      %373 = arith.mulf %372, %371 : vector<16x16xf32>
      %374 = arith.addf %354, %373 : vector<16x16xf32>
      %375 = vector.extract_strided_slice %308 {offsets = [11, 0], sizes = [16, 16], strides = [1, 1]} : vector<32x128xf32> to vector<16x16xf32>
      %376 = vector.broadcast %370 : f32 to vector<16x16xf32>
      %377 = arith.mulf %376, %375 : vector<16x16xf32>
      %378 = arith.addf %358, %377 : vector<16x16xf32>
      %c126_i32 = arith.constant 126 : i32
      %379 = tpu.dynamic_rotate %13 by %c126_i32 dim 1 : vector<32x128xf32>, i32 -> vector<32x128xf32>
      %c126_i32_24 = arith.constant 126 : i32
      %380 = tpu.dynamic_rotate %14 by %c126_i32_24 dim 1 : vector<32x128xf32>, i32 -> vector<32x128xf32>
      %c5 = arith.constant 5 : index
      %381 = memref.load %arg3[%c5] : memref<98xf32, #tpu.memory_space<smem>>
      %c54 = arith.constant 54 : index
      %382 = memref.load %arg3[%c54] : memref<98xf32, #tpu.memory_space<smem>>
      %383 = vector.extract_strided_slice %379 {offsets = [5, 0], sizes = [16, 16], strides = [1, 1]} : vector<32x128xf32> to vector<16x16xf32>
      %384 = vector.broadcast %381 : f32 to vector<16x16xf32>
      %385 = arith.mulf %384, %383 : vector<16x16xf32>
      %386 = arith.addf %364, %385 : vector<16x16xf32>
      %387 = vector.extract_strided_slice %380 {offsets = [5, 0], sizes = [16, 16], strides = [1, 1]} : vector<32x128xf32> to vector<16x16xf32>
      %388 = vector.broadcast %382 : f32 to vector<16x16xf32>
      %389 = arith.mulf %388, %387 : vector<16x16xf32>
      %390 = arith.addf %368, %389 : vector<16x16xf32>
      %c12 = arith.constant 12 : index
      %391 = memref.load %arg3[%c12] : memref<98xf32, #tpu.memory_space<smem>>
      %c61 = arith.constant 61 : index
      %392 = memref.load %arg3[%c61] : memref<98xf32, #tpu.memory_space<smem>>
      %393 = vector.extract_strided_slice %379 {offsets = [6, 0], sizes = [16, 16], strides = [1, 1]} : vector<32x128xf32> to vector<16x16xf32>
      %394 = vector.broadcast %391 : f32 to vector<16x16xf32>
      %395 = arith.mulf %394, %393 : vector<16x16xf32>
      %396 = arith.addf %374, %395 : vector<16x16xf32>
      %397 = vector.extract_strided_slice %380 {offsets = [6, 0], sizes = [16, 16], strides = [1, 1]} : vector<32x128xf32> to vector<16x16xf32>
      %398 = vector.broadcast %392 : f32 to vector<16x16xf32>
      %399 = arith.mulf %398, %397 : vector<16x16xf32>
      %400 = arith.addf %378, %399 : vector<16x16xf32>
      %c19 = arith.constant 19 : index
      %401 = memref.load %arg3[%c19] : memref<98xf32, #tpu.memory_space<smem>>
      %c68 = arith.constant 68 : index
      %402 = memref.load %arg3[%c68] : memref<98xf32, #tpu.memory_space<smem>>
      %403 = vector.extract_strided_slice %379 {offsets = [7, 0], sizes = [16, 16], strides = [1, 1]} : vector<32x128xf32> to vector<16x16xf32>
      %404 = vector.broadcast %401 : f32 to vector<16x16xf32>
      %405 = arith.mulf %404, %403 : vector<16x16xf32>
      %406 = arith.addf %386, %405 : vector<16x16xf32>
      %407 = vector.extract_strided_slice %380 {offsets = [7, 0], sizes = [16, 16], strides = [1, 1]} : vector<32x128xf32> to vector<16x16xf32>
      %408 = vector.broadcast %402 : f32 to vector<16x16xf32>
      %409 = arith.mulf %408, %407 : vector<16x16xf32>
      %410 = arith.addf %390, %409 : vector<16x16xf32>
      %c26 = arith.constant 26 : index
      %411 = memref.load %arg3[%c26] : memref<98xf32, #tpu.memory_space<smem>>
      %c75 = arith.constant 75 : index
      %412 = memref.load %arg3[%c75] : memref<98xf32, #tpu.memory_space<smem>>
      %413 = vector.extract_strided_slice %379 {offsets = [8, 0], sizes = [16, 16], strides = [1, 1]} : vector<32x128xf32> to vector<16x16xf32>
      %414 = vector.broadcast %411 : f32 to vector<16x16xf32>
      %415 = arith.mulf %414, %413 : vector<16x16xf32>
      %416 = arith.addf %396, %415 : vector<16x16xf32>
      %417 = vector.extract_strided_slice %380 {offsets = [8, 0], sizes = [16, 16], strides = [1, 1]} : vector<32x128xf32> to vector<16x16xf32>
      %418 = vector.broadcast %412 : f32 to vector<16x16xf32>
      %419 = arith.mulf %418, %417 : vector<16x16xf32>
      %420 = arith.addf %400, %419 : vector<16x16xf32>
      %c33 = arith.constant 33 : index
      %421 = memref.load %arg3[%c33] : memref<98xf32, #tpu.memory_space<smem>>
      %c82 = arith.constant 82 : index
      %422 = memref.load %arg3[%c82] : memref<98xf32, #tpu.memory_space<smem>>
      %423 = vector.extract_strided_slice %379 {offsets = [9, 0], sizes = [16, 16], strides = [1, 1]} : vector<32x128xf32> to vector<16x16xf32>
      %424 = vector.broadcast %421 : f32 to vector<16x16xf32>
      %425 = arith.mulf %424, %423 : vector<16x16xf32>
      %426 = arith.addf %406, %425 : vector<16x16xf32>
      %427 = vector.extract_strided_slice %380 {offsets = [9, 0], sizes = [16, 16], strides = [1, 1]} : vector<32x128xf32> to vector<16x16xf32>
      %428 = vector.broadcast %422 : f32 to vector<16x16xf32>
      %429 = arith.mulf %428, %427 : vector<16x16xf32>
      %430 = arith.addf %410, %429 : vector<16x16xf32>
      %c40 = arith.constant 40 : index
      %431 = memref.load %arg3[%c40] : memref<98xf32, #tpu.memory_space<smem>>
      %c89 = arith.constant 89 : index
      %432 = memref.load %arg3[%c89] : memref<98xf32, #tpu.memory_space<smem>>
      %433 = vector.extract_strided_slice %379 {offsets = [10, 0], sizes = [16, 16], strides = [1, 1]} : vector<32x128xf32> to vector<16x16xf32>
      %434 = vector.broadcast %431 : f32 to vector<16x16xf32>
      %435 = arith.mulf %434, %433 : vector<16x16xf32>
      %436 = arith.addf %416, %435 : vector<16x16xf32>
      %437 = vector.extract_strided_slice %380 {offsets = [10, 0], sizes = [16, 16], strides = [1, 1]} : vector<32x128xf32> to vector<16x16xf32>
      %438 = vector.broadcast %432 : f32 to vector<16x16xf32>
      %439 = arith.mulf %438, %437 : vector<16x16xf32>
      %440 = arith.addf %420, %439 : vector<16x16xf32>
      %c47 = arith.constant 47 : index
      %441 = memref.load %arg3[%c47] : memref<98xf32, #tpu.memory_space<smem>>
      %c96 = arith.constant 96 : index
      %442 = memref.load %arg3[%c96] : memref<98xf32, #tpu.memory_space<smem>>
      %443 = vector.extract_strided_slice %379 {offsets = [11, 0], sizes = [16, 16], strides = [1, 1]} : vector<32x128xf32> to vector<16x16xf32>
      %444 = vector.broadcast %441 : f32 to vector<16x16xf32>
      %445 = arith.mulf %444, %443 : vector<16x16xf32>
      %446 = arith.addf %426, %445 : vector<16x16xf32>
      %447 = vector.extract_strided_slice %380 {offsets = [11, 0], sizes = [16, 16], strides = [1, 1]} : vector<32x128xf32> to vector<16x16xf32>
      %448 = vector.broadcast %442 : f32 to vector<16x16xf32>
      %449 = arith.mulf %448, %447 : vector<16x16xf32>
      %450 = arith.addf %430, %449 : vector<16x16xf32>
      %c125_i32 = arith.constant 125 : i32
      %451 = tpu.dynamic_rotate %13 by %c125_i32 dim 1 : vector<32x128xf32>, i32 -> vector<32x128xf32>
      %c125_i32_25 = arith.constant 125 : i32
      %452 = tpu.dynamic_rotate %14 by %c125_i32_25 dim 1 : vector<32x128xf32>, i32 -> vector<32x128xf32>
      %c6 = arith.constant 6 : index
      %453 = memref.load %arg3[%c6] : memref<98xf32, #tpu.memory_space<smem>>
      %c55 = arith.constant 55 : index
      %454 = memref.load %arg3[%c55] : memref<98xf32, #tpu.memory_space<smem>>
      %455 = vector.extract_strided_slice %451 {offsets = [5, 0], sizes = [16, 16], strides = [1, 1]} : vector<32x128xf32> to vector<16x16xf32>
      %456 = vector.broadcast %453 : f32 to vector<16x16xf32>
      %457 = arith.mulf %456, %455 : vector<16x16xf32>
      %458 = arith.addf %436, %457 : vector<16x16xf32>
      %459 = vector.extract_strided_slice %452 {offsets = [5, 0], sizes = [16, 16], strides = [1, 1]} : vector<32x128xf32> to vector<16x16xf32>
      %460 = vector.broadcast %454 : f32 to vector<16x16xf32>
      %461 = arith.mulf %460, %459 : vector<16x16xf32>
      %462 = arith.addf %440, %461 : vector<16x16xf32>
      %c13 = arith.constant 13 : index
      %463 = memref.load %arg3[%c13] : memref<98xf32, #tpu.memory_space<smem>>
      %c62 = arith.constant 62 : index
      %464 = memref.load %arg3[%c62] : memref<98xf32, #tpu.memory_space<smem>>
      %465 = vector.extract_strided_slice %451 {offsets = [6, 0], sizes = [16, 16], strides = [1, 1]} : vector<32x128xf32> to vector<16x16xf32>
      %466 = vector.broadcast %463 : f32 to vector<16x16xf32>
      %467 = arith.mulf %466, %465 : vector<16x16xf32>
      %468 = arith.addf %446, %467 : vector<16x16xf32>
      %469 = vector.extract_strided_slice %452 {offsets = [6, 0], sizes = [16, 16], strides = [1, 1]} : vector<32x128xf32> to vector<16x16xf32>
      %470 = vector.broadcast %464 : f32 to vector<16x16xf32>
      %471 = arith.mulf %470, %469 : vector<16x16xf32>
      %472 = arith.addf %450, %471 : vector<16x16xf32>
      %c20 = arith.constant 20 : index
      %473 = memref.load %arg3[%c20] : memref<98xf32, #tpu.memory_space<smem>>
      %c69 = arith.constant 69 : index
      %474 = memref.load %arg3[%c69] : memref<98xf32, #tpu.memory_space<smem>>
      %475 = vector.extract_strided_slice %451 {offsets = [7, 0], sizes = [16, 16], strides = [1, 1]} : vector<32x128xf32> to vector<16x16xf32>
      %476 = vector.broadcast %473 : f32 to vector<16x16xf32>
      %477 = arith.mulf %476, %475 : vector<16x16xf32>
      %478 = arith.addf %458, %477 : vector<16x16xf32>
      %479 = vector.extract_strided_slice %452 {offsets = [7, 0], sizes = [16, 16], strides = [1, 1]} : vector<32x128xf32> to vector<16x16xf32>
      %480 = vector.broadcast %474 : f32 to vector<16x16xf32>
      %481 = arith.mulf %480, %479 : vector<16x16xf32>
      %482 = arith.addf %462, %481 : vector<16x16xf32>
      %c27 = arith.constant 27 : index
      %483 = memref.load %arg3[%c27] : memref<98xf32, #tpu.memory_space<smem>>
      %c76 = arith.constant 76 : index
      %484 = memref.load %arg3[%c76] : memref<98xf32, #tpu.memory_space<smem>>
      %485 = vector.extract_strided_slice %451 {offsets = [8, 0], sizes = [16, 16], strides = [1, 1]} : vector<32x128xf32> to vector<16x16xf32>
      %486 = vector.broadcast %483 : f32 to vector<16x16xf32>
      %487 = arith.mulf %486, %485 : vector<16x16xf32>
      %488 = arith.addf %468, %487 : vector<16x16xf32>
      %489 = vector.extract_strided_slice %452 {offsets = [8, 0], sizes = [16, 16], strides = [1, 1]} : vector<32x128xf32> to vector<16x16xf32>
      %490 = vector.broadcast %484 : f32 to vector<16x16xf32>
      %491 = arith.mulf %490, %489 : vector<16x16xf32>
      %492 = arith.addf %472, %491 : vector<16x16xf32>
      %c34 = arith.constant 34 : index
      %493 = memref.load %arg3[%c34] : memref<98xf32, #tpu.memory_space<smem>>
      %c83 = arith.constant 83 : index
      %494 = memref.load %arg3[%c83] : memref<98xf32, #tpu.memory_space<smem>>
      %495 = vector.extract_strided_slice %451 {offsets = [9, 0], sizes = [16, 16], strides = [1, 1]} : vector<32x128xf32> to vector<16x16xf32>
      %496 = vector.broadcast %493 : f32 to vector<16x16xf32>
      %497 = arith.mulf %496, %495 : vector<16x16xf32>
      %498 = arith.addf %478, %497 : vector<16x16xf32>
      %499 = vector.extract_strided_slice %452 {offsets = [9, 0], sizes = [16, 16], strides = [1, 1]} : vector<32x128xf32> to vector<16x16xf32>
      %500 = vector.broadcast %494 : f32 to vector<16x16xf32>
      %501 = arith.mulf %500, %499 : vector<16x16xf32>
      %502 = arith.addf %482, %501 : vector<16x16xf32>
      %c41 = arith.constant 41 : index
      %503 = memref.load %arg3[%c41] : memref<98xf32, #tpu.memory_space<smem>>
      %c90 = arith.constant 90 : index
      %504 = memref.load %arg3[%c90] : memref<98xf32, #tpu.memory_space<smem>>
      %505 = vector.extract_strided_slice %451 {offsets = [10, 0], sizes = [16, 16], strides = [1, 1]} : vector<32x128xf32> to vector<16x16xf32>
      %506 = vector.broadcast %503 : f32 to vector<16x16xf32>
      %507 = arith.mulf %506, %505 : vector<16x16xf32>
      %508 = arith.addf %488, %507 : vector<16x16xf32>
      %509 = vector.extract_strided_slice %452 {offsets = [10, 0], sizes = [16, 16], strides = [1, 1]} : vector<32x128xf32> to vector<16x16xf32>
      %510 = vector.broadcast %504 : f32 to vector<16x16xf32>
      %511 = arith.mulf %510, %509 : vector<16x16xf32>
      %512 = arith.addf %492, %511 : vector<16x16xf32>
      %c48 = arith.constant 48 : index
      %513 = memref.load %arg3[%c48] : memref<98xf32, #tpu.memory_space<smem>>
      %c97 = arith.constant 97 : index
      %514 = memref.load %arg3[%c97] : memref<98xf32, #tpu.memory_space<smem>>
      %515 = vector.extract_strided_slice %451 {offsets = [11, 0], sizes = [16, 16], strides = [1, 1]} : vector<32x128xf32> to vector<16x16xf32>
      %516 = vector.broadcast %513 : f32 to vector<16x16xf32>
      %517 = arith.mulf %516, %515 : vector<16x16xf32>
      %518 = arith.addf %498, %517 : vector<16x16xf32>
      %519 = vector.extract_strided_slice %452 {offsets = [11, 0], sizes = [16, 16], strides = [1, 1]} : vector<32x128xf32> to vector<16x16xf32>
      %520 = vector.broadcast %514 : f32 to vector<16x16xf32>
      %521 = arith.mulf %520, %519 : vector<16x16xf32>
      %522 = arith.addf %502, %521 : vector<16x16xf32>
      %523 = arith.addf %518, %522 : vector<16x16xf32>
      %524 = arith.addf %508, %512 : vector<16x16xf32>
      %525 = arith.addf %523, %524 : vector<16x16xf32>
      %c0_26 = arith.constant 0 : index
      %526 = memref.load %arg4[%c0_26] : memref<1xf32, #tpu.memory_space<smem>>
      %527 = vector.broadcast %526 : f32 to vector<16x16xf32>
      %528 = arith.addf %525, %527 : vector<16x16xf32>
      %529 = arith.negf %528 : vector<16x16xf32>
      %530 = math.exp %529 : vector<16x16xf32>
      %cst_27 = arith.constant 1.000000e+00 : f32
      %531 = vector.broadcast %cst_27 : f32 to vector<16x16xf32>
      %532 = arith.addf %531, %530 : vector<16x16xf32>
      %533 = arith.divf %531, %532 : vector<16x16xf32>
      %c0_28 = arith.constant 0 : index
      %c0_29 = arith.constant 0 : index
      %c0_30 = arith.constant 0 : index
      %c0_31 = arith.constant 0 : index
      %534 = vector.load %arg5[%c0_28, %c0_29, %c0_30, %c0_31] : memref<1x1x16x16xf32, #tpu.memory_space<vmem>>, vector<1x1x16x16xf32>
      %535 = vector.shape_cast %534 : vector<1x1x16x16xf32> to vector<16x16xf32>
      %536 = vector.shape_cast %533 : vector<16x16xf32> to vector<1x1x16x16xf32>
      tpu.vector_store %arg5[%c0_28, %c0_29, %c0_30, %c0_31], %536 {strides = array<i32>} : memref<1x1x16x16xf32, #tpu.memory_space<vmem>>, vector<1x1x16x16xf32>,
    } else {
    }
    return
  }
  func.func @transform_0(%arg0: i32, %arg1: i32) -> (i32, i32, i32, i32) {
    %c0_i32 = arith.constant 0 : i32
    %c0_i32_0 = arith.constant 0 : i32
    %c0_i32_1 = arith.constant 0 : i32
    return %arg0, %arg1, %c0_i32, %c0_i32_0 : i32, i32, i32, i32
  }
  func.func @transform_1(%arg0: i32, %arg1: i32) -> i32 {
    %c0_i32 = arith.constant 0 : i32
    %c0_i32_0 = arith.constant 0 : i32
    return %c0_i32 : i32
  }
  func.func @transform_2(%arg0: i32, %arg1: i32) -> i32 {
    %c0_i32 = arith.constant 0 : i32
    %c0_i32_0 = arith.constant 0 : i32
    return %c0_i32 : i32
  }
  func.func @transform_3(%arg0: i32, %arg1: i32) -> (i32, i32, i32, i32) {
    %c0_i32 = arith.constant 0 : i32
    %c0_i32_0 = arith.constant 0 : i32
    %c0_i32_1 = arith.constant 0 : i32
    %c0_i32_2 = arith.constant 0 : i32
    return %arg0, %c0_i32, %c0_i32_0, %c0_i32_1 : i32, i32, i32, i32
  }
}

</mosaic_0001>

<llo_original>
// kernel: squeeze.2
$region0: #{squeeze.2}
  %s0 = inlined_call_operand.vmem [shape: f32[7,7], index: 0, kind: input, shape index: {}]
  %s1 = inlined_call_operand.vmem [shape: f32[49], index: 1, kind: output, shape index: {}]
  $region1: #{squeeze.2} parent=0
    #allocation0 [shape = 'u8[4096]{0}', space=vmem, size = 0x1000, scoped, tag = 'scoped mem for output reshape']
    %v2 = vld [vmem:[%s0] sm:$0x1]
    %vm3 = vcmask 56320
    %4 = vst.msk [vmem:[#allocation0] sm:$0x1] %vm3, %v2
    %s5 = scalar_lea.vmem %s0, 6
    %v6 = vld [vmem:[%s5] sm:$0x1]
    %7 = vrot.lane.b32.xlu0 %v6, 42
    %v8 = vpop.permute.xlu0 %7
    %vm9 = vcmask 400720
    %10 = vst.msk [vmem:[#allocation0] sm:$0x1] %vm9, %v8
    %s11 = scalar_lea.vmem %s0, 5
    %v12 = vld [vmem:[%s11] sm:$0x1]
    %13 = vrot.lane.b32.xlu0 %v12, 35
    %v14 = vpop.permute.xlu0 %13
    %vm15 = vcmask 343320
    %16 = vst.msk [vmem:[#allocation0] sm:$0x1] %vm15, %v14
    %s17 = scalar_lea.vmem %s0, 4
    %v18 = vld [vmem:[%s17] sm:$0x1]
    %19 = vrot.lane.b32.xlu0 %v18, 28
    %v20 = vpop.permute.xlu0 %19
    %vm21 = vcmask 285920
    %22 = vst.msk [vmem:[#allocation0] sm:$0x1] %vm21, %v20
    %s23 = scalar_lea.vmem %s0, 3
    %v24 = vld [vmem:[%s23] sm:$0x1]
    %25 = vrot.lane.b32.xlu0 %v24, 21
    %v26 = vpop.permute.xlu0 %25
    %vm27 = vcmask 228520
    %28 = vst.msk [vmem:[#allocation0] sm:$0x1] %vm27, %v26
    %s29 = scalar_lea.vmem %s0, 2
    %v30 = vld [vmem:[%s29] sm:$0x1]
    %31 = vrot.lane.b32.xlu0 %v30, 14
    %v32 = vpop.permute.xlu0 %31
    %vm33 = vcmask 171120
    %34 = vst.msk [vmem:[#allocation0] sm:$0x1] %vm33, %v32
    %s35 = scalar_lea.vmem %s0, 1
    %v36 = vld [vmem:[%s35] sm:$0x1]
    %37 = vrot.lane.b32.xlu0 %v36, 7
    %v38 = vpop.permute.xlu0 %37
    %vm39 = vcmask 113720
    %40 = vst.msk [vmem:[#allocation0] sm:$0x1] %vm39, %v38
    %s42 = sshll.u32 1, 1
    %s43 = ssub.s32 %s42, 1
    %v45 = vld [vmem:[#allocation0] sm:%s43]
    %s46 = sshll.u32 1, 1
    %s47 = ssub.s32 %s46, 1
    %48 = vst [vmem:[%s1] sm:%s47] %v45

// kernel: spatial_attention.1
$region0: #{spatial_attention.1}
  #allocation0 [shape = 'u32[]', space=smem, size = 0x4, offset = 0x4, fixed_abs, tag = 'smem constant byte address 0x4 - core index']
  #allocation1 [shape = 'u32[144,128]{1,0:T(1,128)}', space=vmem, size = 0x12000, scoped, tag = 'internal scratch']
  #allocation2 [shape = 'f32[32,128]{1,0:T(8,128)}', space=vmem, size = 0x4000, scoped, tag = 'scratch operand']
  #allocation3 [shape = 'f32[32,128]{1,0:T(8,128)}', space=vmem, size = 0x4000, scoped, tag = 'scratch operand']
  #allocation4 [shape = 'f32[1]{0:T(128)S(6)}', space=smem, size = 0x200, scoped, tag = 'scoped memory for spatial_attention.1']
  %s0 = inlined_call_operand.hbm [shape: f32[2,4,16,16], index: 0, kind: input, shape index: {}]
  %s1 = inlined_call_operand.vmem [shape: f32[98], index: 1, kind: input, shape index: {}]
  %s2 = inlined_call_operand.<no memory space> [shape: f32[1], index: 2, kind: input, shape index: {}]
  %s3 = inlined_call_operand.hbm [shape: f32[2,1,16,16], index: 3, kind: output, shape index: {}]
  %s4 = sld [smem:[#allocation0]]
  $region65: #{spatial_attention.1} parent=0
    _
  %s6 = ssub.s32 1, %s4
  %s7 = scalar_select 0, %s6, %s4
  %8 = sst [smem:[#allocation4]] %s2
  $region1: #{spatial_attention.1} parent=0
    #allocation5 [shape = 'u8[32768]{0}', space=vmem, size = 0x8000, scoped, tag = 'input window, operand 0']
    #allocation6 [shape = 's32[2]{0}', space=sflag, size = 0x8, scoped, tag = 'scoped memory for spatial_attention.1']
    #allocation7 [shape = 's32[2]{0}', space=sflag, size = 0x8, scoped, tag = 'scoped memory for spatial_attention.1']
    #allocation8 [shape = 's32[2]{0}', space=sflag, size = 0x8, scoped, tag = 'scoped memory for spatial_attention.1']
    #allocation9 [shape = 'u8[512]{0}', space=smem, size = 0x200, scoped, tag = 'input window, operand 1, single buffered']
    #allocation10 [shape = 'u8[16384]{0}', space=vmem, size = 0x4000, scoped, tag = 'output window, operand 0']
    %9 = vsyncpa [#allocation6], 0
    %s10 = scalar_lea.sflag [#allocation6], 1
    %11 = vsyncpa %s10, 0
    %12 = vsyncpa [#allocation8], 0
    %13 = vsyncpa [#allocation7], 0
    %s14 = scalar_lea.sflag [#allocation7], 1
    %15 = vsyncpa %s14, 0
    loop: start=0, step=1, limit=6
    $region2: #{spatial_attention.1} parent=1 // loop_pre_header
      _
    $region3: #{spatial_attention.1} parent=1 // loop_header
      %s17 = sphi 0, %s21
      %p18 = scmp.ge.s32.totalorder %s17, 6
      %s24 = sphi 0, %s36
      %s25 = sphi 0, %s32
      %s26 = sphi 0, %s24
      %s27 = sphi 0, %s25
      %s28 = sphi 0, %s26
      %s29 = sphi 0, %s27
      %s41 = sphi 0, %s43
      %s44 = sphi 0, %s41
      %s45 = sphi 0, %s44
      %s61 = sphi 0, %s45
      %s65 = sphi 0, %s65
      %s67 = sphi 0, %s65
      %s68 = sphi 0, %s67
      %s82 = sphi 0, %s68
      %s86 = sphi 0, %s86
      %s88 = sphi 0, %s86
      %s89 = sphi 0, %s88
      %s103 = sphi 0, %s89
      %s109 = sphi 0, %s111
      %s112 = sphi 0, %s109
      %s113 = sphi 0, %s112
      %s129 = sphi 0, %s113
    $region4: #{spatial_attention.1} parent=1 // loop_header_branch
      %20 = sbr.rel (%p18) target = $region8
    $region5: #{spatial_attention.1} parent=1 // loop_body
      %s22 = ssub.s32 %s17, 1
      %s23 = ssub.s32 %s17, 2
      %s30 = sadd.s32 1, %s25
      %p31 = scmp.ge.s32.totalorder %s30, 2
      %s32 = scalar_select %p31, 0, %s30
      %s33 = sadd.s32 1, %s24
      %s34 = scalar_select %p31, %s33, %s24
      %p35 = scmp.ge.s32.totalorder %s34, 2
      %s36 = scalar_select %p35, 0, %s34
      %s37 = ssub.s32 %s24, %s36
      %s38 = ssub.s32 %s25, %s32
      %s39 = sor.u32 %s37, %s38
      %p40 = scmp.eq.s32.totalorder %s39, 0
      %s42 = sadd.s32 %s41, 1
      %s43 = scalar_select %p40, %s41, %s42
      %p46 = pneg %p40
      %p47 = scmp.eq.s32.totalorder %s17, 3
      %p48 = por %p46, %p47
      %p49 = scmp.ne.s32.totalorder %s41, %s44
      %p50 = scmp.eq.s32.totalorder %s17, 0
      %p51 = por %p49, %p50
      %p52 = scmp.ne.s32.totalorder %s41, %s44
      %p53 = scmp.eq.s32.totalorder %s22, 3
      %p54 = por %p52, %p53
      %p55 = scmp.ne.s32.totalorder %s44, %s45
      %p56 = scmp.eq.s32.totalorder %s22, 0
      %p57 = por %p55, %p56
      %p58 = scmp.ne.s32.totalorder %s44, %s45
      %p59 = scmp.eq.s32.totalorder %s23, 3
      %p60 = por %p58, %p59
      %p62 = scmp.ne.s32.totalorder %s45, %s61
      %p63 = scmp.eq.s32.totalorder %s23, 0
      %p64 = por %p62, %p63
      %s66 = sadd.s32 %s65, 1
      %p69 = scmp.eq.s32.totalorder %s17, 3
      %p70 = scmp.ne.s32.totalorder %s65, %s67
      %p71 = scmp.eq.s32.totalorder %s17, 0
      %p72 = por %p70, %p71
      %p73 = scmp.ne.s32.totalorder %s65, %s67
      %p74 = scmp.eq.s32.totalorder %s22, 3
      %p75 = por %p73, %p74
      %p76 = scmp.ne.s32.totalorder %s67, %s68
      %p77 = scmp.eq.s32.totalorder %s22, 0
      %p78 = por %p76, %p77
      %p79 = scmp.ne.s32.totalorder %s67, %s68
      %p80 = scmp.eq.s32.totalorder %s23, 3
      %p81 = por %p79, %p80
      %p83 = scmp.ne.s32.totalorder %s68, %s82
      %p84 = scmp.eq.s32.totalorder %s23, 0
      %p85 = por %p83, %p84
      %s87 = sadd.s32 %s86, 1
      %p90 = scmp.eq.s32.totalorder %s17, 3
      %p91 = scmp.ne.s32.totalorder %s86, %s88
      %p92 = scmp.eq.s32.totalorder %s17, 0
      %p93 = por %p91, %p92
      %p94 = scmp.ne.s32.totalorder %s86, %s88
      %p95 = scmp.eq.s32.totalorder %s22, 3
      %p96 = por %p94, %p95
      %p97 = scmp.ne.s32.totalorder %s88, %s89
      %p98 = scmp.eq.s32.totalorder %s22, 0
      %p99 = por %p97, %p98
      %p100 = scmp.ne.s32.totalorder %s88, %s89
      %p101 = scmp.eq.s32.totalorder %s23, 3
      %p102 = por %p100, %p101
      %p104 = scmp.ne.s32.totalorder %s89, %s103
      %p105 = scmp.eq.s32.totalorder %s23, 0
      %p106 = por %p104, %p105
      %s107 = ssub.s32 %s24, %s36
      %p108 = scmp.eq.s32.totalorder %s107, 0
      %s110 = sadd.s32 %s109, 1
      %s111 = scalar_select %p108, %s109, %s110
      %p114 = pneg %p108
      %p115 = scmp.eq.s32.totalorder %s17, 3
      %p116 = por %p114, %p115
      %p117 = scmp.ne.s32.totalorder %s109, %s112
      %p118 = scmp.eq.s32.totalorder %s17, 0
      %p119 = por %p117, %p118
      %p120 = scmp.ne.s32.totalorder %s109, %s112
      %p121 = scmp.eq.s32.totalorder %s22, 3
      %p122 = por %p120, %p121
      %p123 = scmp.ne.s32.totalorder %s112, %s113
      %p124 = scmp.eq.s32.totalorder %s22, 0
      %p125 = por %p123, %p124
      %p126 = scmp.ne.s32.totalorder %s112, %s113
      %p127 = scmp.eq.s32.totalorder %s23, 3
      %p128 = por %p126, %p127
      %p130 = scmp.ne.s32.totalorder %s113, %s129
      %p131 = scmp.eq.s32.totalorder %s23, 0
      %p132 = por %p130, %p131
      %p133 = scmp.le.s32.totalorder 1, %s17
      %p134 = scmp.lt.s32.totalorder %s17, 5
      %p135 = pnand %p133, %p134
      %p136 = pneg %p135
      // Predicated region
      $region9: #{spatial_attention.1} parent=5 // pred_check
        _
      $region10: #{spatial_attention.1} parent=5 // pred_check_branch
        %138 = sbr.rel (%p135) target = $region12
      $region11: #{spatial_attention.1} parent=5 // pred_region
        %s139 = ssub.s32 %s17, 1
        // Predicated region
        $region13: #{spatial_attention.1} parent=11 // pred_check
          %p140 = pneg %p78
        $region14: #{spatial_attention.1} parent=11 // pred_check_branch
          %142 = sbr.rel (%p140) target = $region16
        $region15: #{spatial_attention.1} parent=11 // pred_region
          %s144 = ssub.s32 16, 16
          %145 = vsyncadd [#allocation8], %s144
          %s147 = sshll.u32 %s1, 4
          %s148 = int_to_ptr.vmem [resolvable:$true] %s147
          %150 = dma.vmem_to_smem %s148, 16, [#allocation9], [#allocation8]
        $region16: #{spatial_attention.1} parent=11 // pred_fallthru
          _
        // Predicated region
        $region17: #{spatial_attention.1} parent=11 // pred_check
          %p151 = pneg %p99
        $region18: #{spatial_attention.1} parent=11 // pred_check_branch
          %153 = sbr.rel (%p151) target = $region20
        $region19: #{spatial_attention.1} parent=11 // pred_region
          _
        $region20: #{spatial_attention.1} parent=11 // pred_fallthru
          _
      $region12: #{spatial_attention.1} parent=5 // pred_fallthru
        _
      %p154 = scmp.lt.s32.totalorder %s17, 4
      // Predicated region
      $region21: #{spatial_attention.1} parent=5 // pred_check
        %p155 = pneg %p154
      $region22: #{spatial_attention.1} parent=5 // pred_check_branch
        %157 = sbr.rel (%p155) target = $region24
      $region23: #{spatial_attention.1} parent=5 // pred_region
        // Predicated region
        $region25: #{spatial_attention.1} parent=23 // pred_check
          %p158 = pneg %p51
        $region26: #{spatial_attention.1} parent=23 // pred_check_branch
          %160 = sbr.rel (%p158) target = $region28
        $region27: #{spatial_attention.1} parent=23 // pred_region
          %s161 = sand.u32 %s41, 1
          %s162 = scalar_lea.sflag [#allocation6], %s161
          %s163 = sand.u32 %s41, 1
          %s164 = smul.addr %s163, 32
          %s165 = scalar_lea.vmem [#allocation5], %s164
          %s166 = smul.u32 2, %s25
          %s168 = ssub.s32 512, 512
          %169 = vsyncadd %s162, %s168
          %s170 = smul.addr %s166, 2
          %s171 = smul.addr %s24, 8
          %s172 = sadd.s32 %s170, %s171
          %s173 = smul.addr %s172, 128
          %s174 = scalar_lea.hbm %s0, %s173
          %s175 = sshll.u32 %s165, 4
          %s176 = int_to_ptr.vmem [resolvable:$true] %s175
          %181 = dma.hbm_to_vmem [thread:$0]  %s174, 512, %s176, %s162, 128, 128, 8
        $region28: #{spatial_attention.1} parent=23 // pred_fallthru
          _
      $region24: #{spatial_attention.1} parent=5 // pred_fallthru
        _
      %p182 = scmp.le.s32.totalorder 1, %s17
      %p183 = scmp.lt.s32.totalorder %s17, 5
      %p184 = pnand %p182, %p183
      %p185 = pneg %p184
      // Predicated region
      $region29: #{spatial_attention.1} parent=5 // pred_check
        _
      $region30: #{spatial_attention.1} parent=5 // pred_check_branch
        %187 = sbr.rel (%p184) target = $region32
      $region31: #{spatial_attention.1} parent=5 // pred_region
        %s188 = ssub.s32 %s17, 1
        %s189 = sand.u32 %s44, 1
        %s190 = scalar_lea.sflag [#allocation6], %s189
        %s191 = sand.u32 %s44, 1
        %s192 = smul.addr %s191, 32
        %s193 = scalar_lea.vmem [#allocation5], %s192
        // Predicated region
        $region33: #{spatial_attention.1} parent=31 // pred_check
          %p194 = pneg %p57
        $region34: #{spatial_attention.1} parent=31 // pred_check_branch
          %196 = sbr.rel (%p194) target = $region36
        $region35: #{spatial_attention.1} parent=31 // pred_region
          %197 = dma.done %s190, 512
        $region36: #{spatial_attention.1} parent=31 // pred_fallthru
          _
        // Predicated region
        $region37: #{spatial_attention.1} parent=31 // pred_check
          %p198 = pneg %p78
        $region38: #{spatial_attention.1} parent=31 // pred_check_branch
          %200 = sbr.rel (%p198) target = $region40
        $region39: #{spatial_attention.1} parent=31 // pred_region
          %201 = dma.done [#allocation8], 16
        $region40: #{spatial_attention.1} parent=31 // pred_fallthru
          _
        %202 = sfence
        %s203 = sand.u32 %s44, 1
        %s204 = scalar_lea.sflag [#allocation6], %s203
        %s205 = sand.u32 %s44, 1
        %s206 = smul.addr %s205, 32
        %s207 = scalar_lea.vmem [#allocation5], %s206
        %p208 = pneg %p57
        %p209 = pneg %p54
        %p210 = pneg %p78
        %p211 = pneg %p75
        %p212 = pneg %p99
        %p213 = pneg %p96
        %p214 = pneg %p125
        %p215 = pneg %p122
        %s216 = sand.u32 %s112, 1
        %s217 = scalar_lea.sflag [#allocation7], %s216
        %s218 = sand.u32 %s112, 1
        %s219 = smul.addr %s218, 16
        %s220 = scalar_lea.vmem [#allocation10], %s219
        %s221 = smul.u32 2, %s27
        %v222 = vld [vmem:[%s193] sm:$0xff]
        %v223 = vld [vmem:[%s193 + $0x8] sm:$0xff]
        %v224 = vld [vmem:[%s193 + $0x10] sm:$0xff]
        %v225 = vld [vmem:[%s193 + $0x18] sm:$0xff]
        %vm226 = vcmask 130048
        %v227 = vsel %vm226, %v222, -inf
        %v228 = vsel %vm226, %v224, -inf
        %v229 = vmax.f32 %v227, %v228
        %v230 = vsel %vm226, %v223, -inf
        %v231 = vsel %vm226, %v225, -inf
        %v232 = vmax.f32 %v230, %v231
        %v233 = vsel %vm226, %v222, 0.0
        %v234 = vsel %vm226, %v224, 0.0
        %v235 = vadd.f32 %v233, %v234
        %v236 = vsel %vm226, %v223, 0.0
        %v237 = vsel %vm226, %v225, 0.0
        %v238 = vadd.f32 %v236, %v237
        %p239 = scmp.eq.s32.totalorder %s27, 0
        // Predicated region
        $region41: #{spatial_attention.1} parent=31 // pred_check
          %p240 = pneg %p239
        $region42: #{spatial_attention.1} parent=31 // pred_check_branch
          %242 = sbr.rel (%p240) target = $region44
        $region43: #{spatial_attention.1} parent=31 // pred_region
          %243 = vst [vmem:[#allocation2] sm:$0xff] 0.0
          %244 = vst [vmem:[#allocation2 + $0x8] sm:$0xff] 0.0
          %245 = vst [vmem:[#allocation2 + $0x10] sm:$0xff] 0.0
          %246 = vst [vmem:[#allocation2 + $0x18] sm:$0xff] 0.0
          %247 = vst [vmem:[#allocation3] sm:$0xff] 0.0
          %248 = vst [vmem:[#allocation3 + $0x8] sm:$0xff] 0.0
          %249 = vst [vmem:[#allocation3 + $0x10] sm:$0xff] 0.0
          %250 = vst [vmem:[#allocation3 + $0x18] sm:$0xff] 0.0
          %251 = vst.msk [vmem:[#allocation2 + $0x8] sm:$0xff] %vm226, %v229
          %252 = vst.msk [vmem:[#allocation2 + $0x10] sm:$0xff] %vm226, %v232
          %253 = vst.msk [vmem:[#allocation3 + $0x8] sm:$0xff] %vm226, %v235
          %254 = vst.msk [vmem:[#allocation3 + $0x10] sm:$0xff] %vm226, %v238
        $region44: #{spatial_attention.1} parent=31 // pred_fallthru
          _
        %p255 = scmp.gt.s32.totalorder %s27, 0
        // Predicated region
        $region45: #{spatial_attention.1} parent=31 // pred_check
          %p256 = pneg %p255
        $region46: #{spatial_attention.1} parent=31 // pred_check_branch
          %258 = sbr.rel (%p256) target = $region48
        $region47: #{spatial_attention.1} parent=31 // pred_region
          %v259 = vld [vmem:[#allocation2 + $0x8] sm:$0xff]
          %v260 = vld [vmem:[#allocation2 + $0x10] sm:$0xff]
          %v261 = vmax.f32 %v259, %v229
          %v262 = vmax.f32 %v260, %v232
          %263 = vst.msk [vmem:[#allocation2 + $0x8] sm:$0xff] %vm226, %v261
          %264 = vst.msk [vmem:[#allocation2 + $0x10] sm:$0xff] %vm226, %v262
          %v265 = vld [vmem:[#allocation3 + $0x8] sm:$0xff]
          %v266 = vld [vmem:[#allocation3 + $0x10] sm:$0xff]
          %v267 = vadd.f32 %v265, %v235
          %v268 = vadd.f32 %v266, %v238
          %269 = vst.msk [vmem:[#allocation3 + $0x8] sm:$0xff] %vm226, %v267
          %270 = vst.msk [vmem:[#allocation3 + $0x10] sm:$0xff] %vm226, %v268
        $region48: #{spatial_attention.1} parent=31 // pred_fallthru
          _
        %p271 = scmp.eq.s32.totalorder %s27, 1
        // Predicated region
        $region49: #{spatial_attention.1} parent=31 // pred_check
          %p272 = pneg %p271
        $region50: #{spatial_attention.1} parent=31 // pred_check_branch
          %274 = sbr.rel (%p272) target = $region52
        $region51: #{spatial_attention.1} parent=31 // pred_region
          %v275 = vld [vmem:[#allocation2] sm:$0xff]
          %v276 = vld [vmem:[#allocation2 + $0x8] sm:$0xff]
          %v277 = vld [vmem:[#allocation2 + $0x10] sm:$0xff]
          %v278 = vld [vmem:[#allocation2 + $0x18] sm:$0xff]
          %v279 = vld [vmem:[#allocation3] sm:$0xff]
          %v280 = vld [vmem:[#allocation3 + $0x8] sm:$0xff]
          %v281 = vld [vmem:[#allocation3 + $0x10] sm:$0xff]
          %v282 = vld [vmem:[#allocation3 + $0x18] sm:$0xff]
          %283 = vrot.lane.b32.xlu0 %v275, 3
          %v284 = vpop.permute.xlu0 %283
          %285 = vrot.lane.b32.xlu0 %v276, 3
          %v286 = vpop.permute.xlu0 %285
          %287 = vrot.lane.b32.xlu0 %v277, 3
          %v288 = vpop.permute.xlu0 %287
          %289 = vrot.lane.b32.xlu0 %v278, 3
          %v290 = vpop.permute.xlu0 %289
          %291 = vrot.lane.b32.xlu0 %v279, 3
          %v292 = vpop.permute.xlu0 %291
          %293 = vrot.lane.b32.xlu0 %v280, 3
          %v294 = vpop.permute.xlu0 %293
          %295 = vrot.lane.b32.xlu0 %v281, 3
          %v296 = vpop.permute.xlu0 %295
          %297 = vrot.lane.b32.xlu0 %v282, 3
          %v298 = vpop.permute.xlu0 %297
          %s299 = sld [smem:[#allocation9]]
          %s300 = sld [smem:[#allocation9 + $0x31]]
          %v301 = vstv %s299
          %v302 = vmul.f32 %v301, %v284
          %v303 = vmul.f32 %v301, %v286
          %v304 = vmul.f32 %v301, %v288
          %v305 = vadd.f32 %v302, 0.0
          %v306 = vadd.f32 %v303, 0.0
          %v307 = vadd.f32 %v304, 0.0
          %v308 = vstv %s300
          %v309 = vmul.f32 %v308, %v292
          %v310 = vmul.f32 %v308, %v294
          %v311 = vmul.f32 %v308, %v296
          %v312 = vadd.f32 %v309, 0.0
          %v313 = vadd.f32 %v310, 0.0
          %v314 = vadd.f32 %v311, 0.0
          %s315 = sld [smem:[#allocation9 + $0x7]]
          %s316 = sld [smem:[#allocation9 + $0x38]]
          %v317 = vstv %s315
          %v318 = vmul.f32 %v317, %v284
          %v319 = vmul.f32 %v317, %v286
          %v320 = vmul.f32 %v317, %v288
          %v321 = vadd.f32 %v318, 0.0
          %v322 = vadd.f32 %v319, 0.0
          %v323 = vadd.f32 %v320, 0.0
          %v324 = vstv %s316
          %v325 = vmul.f32 %v324, %v292
          %v326 = vmul.f32 %v324, %v294
          %v327 = vmul.f32 %v324, %v296
          %v328 = vadd.f32 %v325, 0.0
          %v329 = vadd.f32 %v326, 0.0
          %v330 = vadd.f32 %v327, 0.0
          %s331 = sld [smem:[#allocation9 + $0xe]]
          %s332 = sld [smem:[#allocation9 + $0x3f]]
          %v333 = vstv %s331
          %v334 = vmul.f32 %v333, %v284
          %v335 = vmul.f32 %v333, %v286
          %v336 = vmul.f32 %v333, %v288
          %vm340 = vcmask 1045504
          %v341 = vrot.slane %v334, 2
          %v342 = vrot.slane %v335, 2
          %v343 = vsel %vm340, %v341, %v342
          %v344 = vrot.slane %v336, 2
          %v345 = vsel %vm340, %v342, %v344
          %v349 = vadd.f32 %v305, %v343
          %v350 = vadd.f32 %v306, %v345
          %v351 = vadd.f32 %v307, %v344
          %v352 = vstv %s332
          %v353 = vmul.f32 %v352, %v292
          %v354 = vmul.f32 %v352, %v294
          %v355 = vmul.f32 %v352, %v296
          %v359 = vrot.slane %v353, 2
          %v360 = vrot.slane %v354, 2
          %v361 = vsel %vm340, %v359, %v360
          %v362 = vrot.slane %v355, 2
          %v363 = vsel %vm340, %v360, %v362
          %v367 = vadd.f32 %v312, %v361
          %v368 = vadd.f32 %v313, %v363
          %v369 = vadd.f32 %v314, %v362
          %s370 = sld [smem:[#allocation9 + $0x15]]
          %s371 = sld [smem:[#allocation9 + $0x46]]
          %v372 = vstv %s370
          %v373 = vmul.f32 %v372, %v286
          %v374 = vmul.f32 %v372, %v288
          %v377 = vrot.slane %v373, 2
          %v378 = vrot.slane %v374, 2
          %v379 = vsel %vm340, %v377, %v378
          %v383 = vadd.f32 %v321, %v377
          %v384 = vadd.f32 %v322, %v379
          %v385 = vadd.f32 %v323, %v378
          %v386 = vstv %s371
          %v387 = vmul.f32 %v386, %v294
          %v388 = vmul.f32 %v386, %v296
          %v391 = vrot.slane %v387, 2
          %v392 = vrot.slane %v388, 2
          %v393 = vsel %vm340, %v391, %v392
          %v397 = vadd.f32 %v328, %v391
          %v398 = vadd.f32 %v329, %v393
          %v399 = vadd.f32 %v330, %v392
          %s400 = sld [smem:[#allocation9 + $0x1c]]
          %s401 = sld [smem:[#allocation9 + $0x4d]]
          %v402 = vstv %s400
          %v403 = vmul.f32 %v402, %v286
          %v404 = vmul.f32 %v402, %v288
          %v405 = vmul.f32 %v402, %v290
          %vm409 = vcmask 1043456
          %v410 = vrot.slane %v403, 4
          %v411 = vrot.slane %v404, 4
          %v412 = vsel %vm409, %v410, %v411
          %v413 = vrot.slane %v405, 4
          %v414 = vsel %vm409, %v411, %v413
          %v418 = vadd.f32 %v349, %v410
          %v419 = vadd.f32 %v350, %v412
          %v420 = vadd.f32 %v351, %v414
          %v421 = vstv %s401
          %v422 = vmul.f32 %v421, %v294
          %v423 = vmul.f32 %v421, %v296
          %v424 = vmul.f32 %v421, %v298
          %v428 = vrot.slane %v422, 4
          %v429 = vrot.slane %v423, 4
          %v430 = vsel %vm409, %v428, %v429
          %v431 = vrot.slane %v424, 4
          %v432 = vsel %vm409, %v429, %v431
          %v436 = vadd.f32 %v367, %v428
          %v437 = vadd.f32 %v368, %v430
          %v438 = vadd.f32 %v369, %v432
          %s439 = sld [smem:[#allocation9 + $0x23]]
          %s440 = sld [smem:[#allocation9 + $0x54]]
          %v441 = vstv %s439
          %v442 = vmul.f32 %v441, %v286
          %v443 = vmul.f32 %v441, %v288
          %v444 = vmul.f32 %v441, %v290
          %v448 = vrot.slane %v442, 4
          %v449 = vrot.slane %v443, 4
          %v450 = vsel %vm409, %v448, %v449
          %v451 = vrot.slane %v444, 4
          %v452 = vsel %vm409, %v449, %v451
          %v456 = vadd.f32 %v383, %v448
          %v457 = vadd.f32 %v384, %v450
          %v458 = vadd.f32 %v385, %v452
          %v459 = vstv %s440
          %v460 = vmul.f32 %v459, %v294
          %v461 = vmul.f32 %v459, %v296
          %v462 = vmul.f32 %v459, %v298
          %v466 = vrot.slane %v460, 4
          %v467 = vrot.slane %v461, 4
          %v468 = vsel %vm409, %v466, %v467
          %v469 = vrot.slane %v462, 4
          %v470 = vsel %vm409, %v467, %v469
          %v474 = vadd.f32 %v397, %v466
          %v475 = vadd.f32 %v398, %v468
          %v476 = vadd.f32 %v399, %v470
          %s477 = sld [smem:[#allocation9 + $0x2a]]
          %s478 = sld [smem:[#allocation9 + $0x5b]]
          %v479 = vstv %s477
          %v480 = vmul.f32 %v479, %v286
          %v481 = vmul.f32 %v479, %v288
          %v482 = vmul.f32 %v479, %v290
          %vm486 = vcmask 1041408
          %v487 = vrot.slane %v480, 6
          %v488 = vrot.slane %v481, 6
          %v489 = vsel %vm486, %v487, %v488
          %v490 = vrot.slane %v482, 6
          %v491 = vsel %vm486, %v488, %v490
          %v495 = vadd.f32 %v418, %v487
          %v496 = vadd.f32 %v419, %v489
          %v497 = vadd.f32 %v420, %v491
          %v498 = vstv %s478
          %v499 = vmul.f32 %v498, %v294
          %v500 = vmul.f32 %v498, %v296
          %v501 = vmul.f32 %v498, %v298
          %v505 = vrot.slane %v499, 6
          %v506 = vrot.slane %v500, 6
          %v507 = vsel %vm486, %v505, %v506
          %v508 = vrot.slane %v501, 6
          %v509 = vsel %vm486, %v506, %v508
          %v513 = vadd.f32 %v436, %v505
          %v514 = vadd.f32 %v437, %v507
          %v515 = vadd.f32 %v438, %v509
          %516 = vrot.lane.b32.xlu0 %v275, 2
          %v517 = vpop.permute.xlu0 %516
          %518 = vrot.lane.b32.xlu0 %v276, 2
          %v519 = vpop.permute.xlu0 %518
          %520 = vrot.lane.b32.xlu0 %v277, 2
          %v521 = vpop.permute.xlu0 %520
          %522 = vrot.lane.b32.xlu0 %v278, 2
          %v523 = vpop.permute.xlu0 %522
          %524 = vrot.lane.b32.xlu0 %v279, 2
          %v525 = vpop.permute.xlu0 %524
          %526 = vrot.lane.b32.xlu0 %v280, 2
          %v527 = vpop.permute.xlu0 %526
          %528 = vrot.lane.b32.xlu0 %v281, 2
          %v529 = vpop.permute.xlu0 %528
          %530 = vrot.lane.b32.xlu0 %v282, 2
          %v531 = vpop.permute.xlu0 %530
          %s532 = sld [smem:[#allocation9 + $0x1]]
          %s533 = sld [smem:[#allocation9 + $0x32]]
          %v534 = vstv %s532
          %v535 = vmul.f32 %v534, %v517
          %v536 = vmul.f32 %v534, %v519
          %v537 = vmul.f32 %v534, %v521
          %vm541 = vcmask 1040384
          %v542 = vrot.slane %v535, 7
          %v543 = vrot.slane %v536, 7
          %v544 = vsel %vm541, %v542, %v543
          %v545 = vrot.slane %v537, 7
          %v546 = vsel %vm541, %v543, %v545
          %v550 = vadd.f32 %v456, %v542
          %v551 = vadd.f32 %v457, %v544
          %v552 = vadd.f32 %v458, %v546
          %v553 = vstv %s533
          %v554 = vmul.f32 %v553, %v525
          %v555 = vmul.f32 %v553, %v527
          %v556 = vmul.f32 %v553, %v529
          %v560 = vrot.slane %v554, 7
          %v561 = vrot.slane %v555, 7
          %v562 = vsel %vm541, %v560, %v561
          %v563 = vrot.slane %v556, 7
          %v564 = vsel %vm541, %v561, %v563
          %v568 = vadd.f32 %v474, %v560
          %v569 = vadd.f32 %v475, %v562
          %v570 = vadd.f32 %v476, %v564
          %s571 = sld [smem:[#allocation9 + $0x8]]
          %s572 = sld [smem:[#allocation9 + $0x39]]
          %v573 = vstv %s571
          %v574 = vmul.f32 %v573, %v517
          %v575 = vmul.f32 %v573, %v519
          %v576 = vmul.f32 %v573, %v521
          %vm580 = vcmask 1046528
          %v581 = vrot.slane %v574, 1
          %v582 = vrot.slane %v575, 1
          %v583 = vsel %vm580, %v581, %v582
          %v584 = vrot.slane %v576, 1
          %v585 = vsel %vm580, %v582, %v584
          %v589 = vadd.f32 %v495, %v583
          %v590 = vadd.f32 %v496, %v585
          %v591 = vadd.f32 %v497, %v584
          %v592 = vstv %s572
          %v593 = vmul.f32 %v592, %v525
          %v594 = vmul.f32 %v592, %v527
          %v595 = vmul.f32 %v592, %v529
          %v599 = vrot.slane %v593, 1
          %v600 = vrot.slane %v594, 1
          %v601 = vsel %vm580, %v599, %v600
          %v602 = vrot.slane %v595, 1
          %v603 = vsel %vm580, %v600, %v602
          %v607 = vadd.f32 %v513, %v601
          %v608 = vadd.f32 %v514, %v603
          %v609 = vadd.f32 %v515, %v602
          %s610 = sld [smem:[#allocation9 + $0xf]]
          %s611 = sld [smem:[#allocation9 + $0x40]]
          %v612 = vstv %s610
          %v613 = vmul.f32 %v612, %v517
          %v614 = vmul.f32 %v612, %v519
          %v615 = vmul.f32 %v612, %v521
          %v619 = vrot.slane %v613, 1
          %v620 = vrot.slane %v614, 1
          %v621 = vsel %vm580, %v619, %v620
          %v622 = vrot.slane %v615, 1
          %v623 = vsel %vm580, %v620, %v622
          %v627 = vadd.f32 %v550, %v621
          %v628 = vadd.f32 %v551, %v623
          %v629 = vadd.f32 %v552, %v622
          %v630 = vstv %s611
          %v631 = vmul.f32 %v630, %v525
          %v632 = vmul.f32 %v630, %v527
          %v633 = vmul.f32 %v630, %v529
          %v637 = vrot.slane %v631, 1
          %v638 = vrot.slane %v632, 1
          %v639 = vsel %vm580, %v637, %v638
          %v640 = vrot.slane %v633, 1
          %v641 = vsel %vm580, %v638, %v640
          %v645 = vadd.f32 %v568, %v639
          %v646 = vadd.f32 %v569, %v641
          %v647 = vadd.f32 %v570, %v640
          %s648 = sld [smem:[#allocation9 + $0x16]]
          %s649 = sld [smem:[#allocation9 + $0x47]]
          %v650 = vstv %s648
          %v651 = vmul.f32 %v650, %v519
          %v652 = vmul.f32 %v650, %v521
          %vm655 = vcmask 1044480
          %v656 = vrot.slane %v651, 3
          %v657 = vrot.slane %v652, 3
          %v658 = vsel %vm655, %v656, %v657
          %v662 = vadd.f32 %v589, %v656
          %v663 = vadd.f32 %v590, %v658
          %v664 = vadd.f32 %v591, %v657
          %v665 = vstv %s649
          %v666 = vmul.f32 %v665, %v527
          %v667 = vmul.f32 %v665, %v529
          %v670 = vrot.slane %v666, 3
          %v671 = vrot.slane %v667, 3
          %v672 = vsel %vm655, %v670, %v671
          %v676 = vadd.f32 %v607, %v670
          %v677 = vadd.f32 %v608, %v672
          %v678 = vadd.f32 %v609, %v671
          %s679 = sld [smem:[#allocation9 + $0x1d]]
          %s680 = sld [smem:[#allocation9 + $0x4e]]
          %v681 = vstv %s679
          %v682 = vmul.f32 %v681, %v519
          %v683 = vmul.f32 %v681, %v521
          %v684 = vmul.f32 %v681, %v523
          %v688 = vrot.slane %v682, 3
          %v689 = vrot.slane %v683, 3
          %v690 = vsel %vm655, %v688, %v689
          %v691 = vrot.slane %v684, 3
          %v692 = vsel %vm655, %v689, %v691
          %v696 = vadd.f32 %v627, %v688
          %v697 = vadd.f32 %v628, %v690
          %v698 = vadd.f32 %v629, %v692
          %v699 = vstv %s680
          %v700 = vmul.f32 %v699, %v527
          %v701 = vmul.f32 %v699, %v529
          %v702 = vmul.f32 %v699, %v531
          %v706 = vrot.slane %v700, 3
          %v707 = vrot.slane %v701, 3
          %v708 = vsel %vm655, %v706, %v707
          %v709 = vrot.slane %v702, 3
          %v710 = vsel %vm655, %v707, %v709
          %v714 = vadd.f32 %v645, %v706
          %v715 = vadd.f32 %v646, %v708
          %v716 = vadd.f32 %v647, %v710
          %s717 = sld [smem:[#allocation9 + $0x24]]
          %s718 = sld [smem:[#allocation9 + $0x55]]
          %v719 = vstv %s717
          %v720 = vmul.f32 %v719, %v519
          %v721 = vmul.f32 %v719, %v521
          %v722 = vmul.f32 %v719, %v523
          %vm726 = vcmask 1042432
          %v727 = vrot.slane %v720, 5
          %v728 = vrot.slane %v721, 5
          %v729 = vsel %vm726, %v727, %v728
          %v730 = vrot.slane %v722, 5
          %v731 = vsel %vm726, %v728, %v730
          %v735 = vadd.f32 %v662, %v727
          %v736 = vadd.f32 %v663, %v729
          %v737 = vadd.f32 %v664, %v731
          %v738 = vstv %s718
          %v739 = vmul.f32 %v738, %v527
          %v740 = vmul.f32 %v738, %v529
          %v741 = vmul.f32 %v738, %v531
          %v745 = vrot.slane %v739, 5
          %v746 = vrot.slane %v740, 5
          %v747 = vsel %vm726, %v745, %v746
          %v748 = vrot.slane %v741, 5
          %v749 = vsel %vm726, %v746, %v748
          %v753 = vadd.f32 %v676, %v745
          %v754 = vadd.f32 %v677, %v747
          %v755 = vadd.f32 %v678, %v749
          %s756 = sld [smem:[#allocation9 + $0x2b]]
          %s757 = sld [smem:[#allocation9 + $0x5c]]
          %v758 = vstv %s756
          %v759 = vmul.f32 %v758, %v519
          %v760 = vmul.f32 %v758, %v521
          %v761 = vmul.f32 %v758, %v523
          %v765 = vrot.slane %v759, 5
          %v766 = vrot.slane %v760, 5
          %v767 = vsel %vm726, %v765, %v766
          %v768 = vrot.slane %v761, 5
          %v769 = vsel %vm726, %v766, %v768
          %v773 = vadd.f32 %v696, %v765
          %v774 = vadd.f32 %v697, %v767
          %v775 = vadd.f32 %v698, %v769
          %v776 = vstv %s757
          %v777 = vmul.f32 %v776, %v527
          %v778 = vmul.f32 %v776, %v529
          %v779 = vmul.f32 %v776, %v531
          %v783 = vrot.slane %v777, 5
          %v784 = vrot.slane %v778, 5
          %v785 = vsel %vm726, %v783, %v784
          %v786 = vrot.slane %v779, 5
          %v787 = vsel %vm726, %v784, %v786
          %v791 = vadd.f32 %v714, %v783
          %v792 = vadd.f32 %v715, %v785
          %v793 = vadd.f32 %v716, %v787
          %794 = vrot.lane.b32.xlu0 %v275, 1
          %v795 = vpop.permute.xlu0 %794
          %796 = vrot.lane.b32.xlu0 %v276, 1
          %v797 = vpop.permute.xlu0 %796
          %798 = vrot.lane.b32.xlu0 %v277, 1
          %v799 = vpop.permute.xlu0 %798
          %800 = vrot.lane.b32.xlu0 %v278, 1
          %v801 = vpop.permute.xlu0 %800
          %802 = vrot.lane.b32.xlu0 %v279, 1
          %v803 = vpop.permute.xlu0 %802
          %804 = vrot.lane.b32.xlu0 %v280, 1
          %v805 = vpop.permute.xlu0 %804
          %806 = vrot.lane.b32.xlu0 %v281, 1
          %v807 = vpop.permute.xlu0 %806
          %808 = vrot.lane.b32.xlu0 %v282, 1
          %v809 = vpop.permute.xlu0 %808
          %s810 = sld [smem:[#allocation9 + $0x2]]
          %s811 = sld [smem:[#allocation9 + $0x33]]
          %v812 = vstv %s810
          %v813 = vmul.f32 %v812, %v795
          %v814 = vmul.f32 %v812, %v797
          %v815 = vmul.f32 %v812, %v799
          %v816 = vadd.f32 %v735, %v813
          %v817 = vadd.f32 %v736, %v814
          %v818 = vadd.f32 %v737, %v815
          %v819 = vstv %s811
          %v820 = vmul.f32 %v819, %v803
          %v821 = vmul.f32 %v819, %v805
          %v822 = vmul.f32 %v819, %v807
          %v823 = vadd.f32 %v753, %v820
          %v824 = vadd.f32 %v754, %v821
          %v825 = vadd.f32 %v755, %v822
          %s826 = sld [smem:[#allocation9 + $0x9]]
          %s827 = sld [smem:[#allocation9 + $0x3a]]
          %v828 = vstv %s826
          %v829 = vmul.f32 %v828, %v795
          %v830 = vmul.f32 %v828, %v797
          %v831 = vmul.f32 %v828, %v799
          %v832 = vadd.f32 %v773, %v829
          %v833 = vadd.f32 %v774, %v830
          %v834 = vadd.f32 %v775, %v831
          %v835 = vstv %s827
          %v836 = vmul.f32 %v835, %v803
          %v837 = vmul.f32 %v835, %v805
          %v838 = vmul.f32 %v835, %v807
          %v839 = vadd.f32 %v791, %v836
          %v840 = vadd.f32 %v792, %v837
          %v841 = vadd.f32 %v793, %v838
          %s842 = sld [smem:[#allocation9 + $0x10]]
          %s843 = sld [smem:[#allocation9 + $0x41]]
          %v844 = vstv %s842
          %v845 = vmul.f32 %v844, %v795
          %v846 = vmul.f32 %v844, %v797
          %v847 = vmul.f32 %v844, %v799
          %v851 = vrot.slane %v845, 2
          %v852 = vrot.slane %v846, 2
          %v853 = vsel %vm340, %v851, %v852
          %v854 = vrot.slane %v847, 2
          %v855 = vsel %vm340, %v852, %v854
          %v859 = vadd.f32 %v816, %v853
          %v860 = vadd.f32 %v817, %v855
          %v861 = vadd.f32 %v818, %v854
          %v862 = vstv %s843
          %v863 = vmul.f32 %v862, %v803
          %v864 = vmul.f32 %v862, %v805
          %v865 = vmul.f32 %v862, %v807
          %v869 = vrot.slane %v863, 2
          %v870 = vrot.slane %v864, 2
          %v871 = vsel %vm340, %v869, %v870
          %v872 = vrot.slane %v865, 2
          %v873 = vsel %vm340, %v870, %v872
          %v877 = vadd.f32 %v823, %v871
          %v878 = vadd.f32 %v824, %v873
          %v879 = vadd.f32 %v825, %v872
          %s880 = sld [smem:[#allocation9 + $0x17]]
          %s881 = sld [smem:[#allocation9 + $0x48]]
          %v882 = vstv %s880
          %v883 = vmul.f32 %v882, %v797
          %v884 = vmul.f32 %v882, %v799
          %v887 = vrot.slane %v883, 2
          %v888 = vrot.slane %v884, 2
          %v889 = vsel %vm340, %v887, %v888
          %v893 = vadd.f32 %v832, %v887
          %v894 = vadd.f32 %v833, %v889
          %v895 = vadd.f32 %v834, %v888
          %v896 = vstv %s881
          %v897 = vmul.f32 %v896, %v805
          %v898 = vmul.f32 %v896, %v807
          %v901 = vrot.slane %v897, 2
          %v902 = vrot.slane %v898, 2
          %v903 = vsel %vm340, %v901, %v902
          %v907 = vadd.f32 %v839, %v901
          %v908 = vadd.f32 %v840, %v903
          %v909 = vadd.f32 %v841, %v902
          %s910 = sld [smem:[#allocation9 + $0x1e]]
          %s911 = sld [smem:[#allocation9 + $0x4f]]
          %v912 = vstv %s910
          %v913 = vmul.f32 %v912, %v797
          %v914 = vmul.f32 %v912, %v799
          %v915 = vmul.f32 %v912, %v801
          %v919 = vrot.slane %v913, 4
          %v920 = vrot.slane %v914, 4
          %v921 = vsel %vm409, %v919, %v920
          %v922 = vrot.slane %v915, 4
          %v923 = vsel %vm409, %v920, %v922
          %v927 = vadd.f32 %v859, %v919
          %v928 = vadd.f32 %v860, %v921
          %v929 = vadd.f32 %v861, %v923
          %v930 = vstv %s911
          %v931 = vmul.f32 %v930, %v805
          %v932 = vmul.f32 %v930, %v807
          %v933 = vmul.f32 %v930, %v809
          %v937 = vrot.slane %v931, 4
          %v938 = vrot.slane %v932, 4
          %v939 = vsel %vm409, %v937, %v938
          %v940 = vrot.slane %v933, 4
          %v941 = vsel %vm409, %v938, %v940
          %v945 = vadd.f32 %v877, %v937
          %v946 = vadd.f32 %v878, %v939
          %v947 = vadd.f32 %v879, %v941
          %s948 = sld [smem:[#allocation9 + $0x25]]
          %s949 = sld [smem:[#allocation9 + $0x56]]
          %v950 = vstv %s948
          %v951 = vmul.f32 %v950, %v797
          %v952 = vmul.f32 %v950, %v799
          %v953 = vmul.f32 %v950, %v801
          %v957 = vrot.slane %v951, 4
          %v958 = vrot.slane %v952, 4
          %v959 = vsel %vm409, %v957, %v958
          %v960 = vrot.slane %v953, 4
          %v961 = vsel %vm409, %v958, %v960
          %v965 = vadd.f32 %v893, %v957
          %v966 = vadd.f32 %v894, %v959
          %v967 = vadd.f32 %v895, %v961
          %v968 = vstv %s949
          %v969 = vmul.f32 %v968, %v805
          %v970 = vmul.f32 %v968, %v807
          %v971 = vmul.f32 %v968, %v809
          %v975 = vrot.slane %v969, 4
          %v976 = vrot.slane %v970, 4
          %v977 = vsel %vm409, %v975, %v976
          %v978 = vrot.slane %v971, 4
          %v979 = vsel %vm409, %v976, %v978
          %v983 = vadd.f32 %v907, %v975
          %v984 = vadd.f32 %v908, %v977
          %v985 = vadd.f32 %v909, %v979
          %s986 = sld [smem:[#allocation9 + $0x2c]]
          %s987 = sld [smem:[#allocation9 + $0x5d]]
          %v988 = vstv %s986
          %v989 = vmul.f32 %v988, %v797
          %v990 = vmul.f32 %v988, %v799
          %v991 = vmul.f32 %v988, %v801
          %v995 = vrot.slane %v989, 6
          %v996 = vrot.slane %v990, 6
          %v997 = vsel %vm486, %v995, %v996
          %v998 = vrot.slane %v991, 6
          %v999 = vsel %vm486, %v996, %v998
          %v1003 = vadd.f32 %v927, %v995
          %v1004 = vadd.f32 %v928, %v997
          %v1005 = vadd.f32 %v929, %v999
          %v1006 = vstv %s987
          %v1007 = vmul.f32 %v1006, %v805
          %v1008 = vmul.f32 %v1006, %v807
          %v1009 = vmul.f32 %v1006, %v809
          %v1013 = vrot.slane %v1007, 6
          %v1014 = vrot.slane %v1008, 6
          %v1015 = vsel %vm486, %v1013, %v1014
          %v1016 = vrot.slane %v1009, 6
          %v1017 = vsel %vm486, %v1014, %v1016
          %v1021 = vadd.f32 %v945, %v1013
          %v1022 = vadd.f32 %v946, %v1015
          %v1023 = vadd.f32 %v947, %v1017
          %s1024 = sld [smem:[#allocation9 + $0x3]]
          %s1025 = sld [smem:[#allocation9 + $0x34]]
          %v1026 = vstv %s1024
          %v1027 = vmul.f32 %v1026, %v275
          %v1028 = vmul.f32 %v1026, %v276
          %v1029 = vmul.f32 %v1026, %v277
          %v1033 = vrot.slane %v1027, 7
          %v1034 = vrot.slane %v1028, 7
          %v1035 = vsel %vm541, %v1033, %v1034
          %v1036 = vrot.slane %v1029, 7
          %v1037 = vsel %vm541, %v1034, %v1036
          %v1041 = vadd.f32 %v965, %v1033
          %v1042 = vadd.f32 %v966, %v1035
          %v1043 = vadd.f32 %v967, %v1037
          %v1044 = vstv %s1025
          %v1045 = vmul.f32 %v1044, %v279
          %v1046 = vmul.f32 %v1044, %v280
          %v1047 = vmul.f32 %v1044, %v281
          %v1051 = vrot.slane %v1045, 7
          %v1052 = vrot.slane %v1046, 7
          %v1053 = vsel %vm541, %v1051, %v1052
          %v1054 = vrot.slane %v1047, 7
          %v1055 = vsel %vm541, %v1052, %v1054
          %v1059 = vadd.f32 %v983, %v1051
          %v1060 = vadd.f32 %v984, %v1053
          %v1061 = vadd.f32 %v985, %v1055
          %s1062 = sld [smem:[#allocation9 + $0xa]]
          %s1063 = sld [smem:[#allocation9 + $0x3b]]
          %v1064 = vstv %s1062
          %v1065 = vmul.f32 %v1064, %v275
          %v1066 = vmul.f32 %v1064, %v276
          %v1067 = vmul.f32 %v1064, %v277
          %v1071 = vrot.slane %v1065, 1
          %v1072 = vrot.slane %v1066, 1
          %v1073 = vsel %vm580, %v1071, %v1072
          %v1074 = vrot.slane %v1067, 1
          %v1075 = vsel %vm580, %v1072, %v1074
          %v1079 = vadd.f32 %v1003, %v1073
          %v1080 = vadd.f32 %v1004, %v1075
          %v1081 = vadd.f32 %v1005, %v1074
          %v1082 = vstv %s1063
          %v1083 = vmul.f32 %v1082, %v279
          %v1084 = vmul.f32 %v1082, %v280
          %v1085 = vmul.f32 %v1082, %v281
          %v1089 = vrot.slane %v1083, 1
          %v1090 = vrot.slane %v1084, 1
          %v1091 = vsel %vm580, %v1089, %v1090
          %v1092 = vrot.slane %v1085, 1
          %v1093 = vsel %vm580, %v1090, %v1092
          %v1097 = vadd.f32 %v1021, %v1091
          %v1098 = vadd.f32 %v1022, %v1093
          %v1099 = vadd.f32 %v1023, %v1092
          %s1100 = sld [smem:[#allocation9 + $0x11]]
          %s1101 = sld [smem:[#allocation9 + $0x42]]
          %v1102 = vstv %s1100
          %v1103 = vmul.f32 %v1102, %v275
          %v1104 = vmul.f32 %v1102, %v276
          %v1105 = vmul.f32 %v1102, %v277
          %v1109 = vrot.slane %v1103, 1
          %v1110 = vrot.slane %v1104, 1
          %v1111 = vsel %vm580, %v1109, %v1110
          %v1112 = vrot.slane %v1105, 1
          %v1113 = vsel %vm580, %v1110, %v1112
          %v1117 = vadd.f32 %v1041, %v1111
          %v1118 = vadd.f32 %v1042, %v1113
          %v1119 = vadd.f32 %v1043, %v1112
          %v1120 = vstv %s1101
          %v1121 = vmul.f32 %v1120, %v279
          %v1122 = vmul.f32 %v1120, %v280
          %v1123 = vmul.f32 %v1120, %v281
          %v1127 = vrot.slane %v1121, 1
          %v1128 = vrot.slane %v1122, 1
          %v1129 = vsel %vm580, %v1127, %v1128
          %v1130 = vrot.slane %v1123, 1
          %v1131 = vsel %vm580, %v1128, %v1130
          %v1135 = vadd.f32 %v1059, %v1129
          %v1136 = vadd.f32 %v1060, %v1131
          %v1137 = vadd.f32 %v1061, %v1130
          %s1138 = sld [smem:[#allocation9 + $0x18]]
          %s1139 = sld [smem:[#allocation9 + $0x49]]
          %v1140 = vstv %s1138
          %v1141 = vmul.f32 %v1140, %v276
          %v1142 = vmul.f32 %v1140, %v277
          %v1145 = vrot.slane %v1141, 3
          %v1146 = vrot.slane %v1142, 3
          %v1147 = vsel %vm655, %v1145, %v1146
          %v1151 = vadd.f32 %v1079, %v1145
          %v1152 = vadd.f32 %v1080, %v1147
          %v1153 = vadd.f32 %v1081, %v1146
          %v1154 = vstv %s1139
          %v1155 = vmul.f32 %v1154, %v280
          %v1156 = vmul.f32 %v1154, %v281
          %v1159 = vrot.slane %v1155, 3
          %v1160 = vrot.slane %v1156, 3
          %v1161 = vsel %vm655, %v1159, %v1160
          %v1165 = vadd.f32 %v1097, %v1159
          %v1166 = vadd.f32 %v1098, %v1161
          %v1167 = vadd.f32 %v1099, %v1160
          %s1168 = sld [smem:[#allocation9 + $0x1f]]
          %s1169 = sld [smem:[#allocation9 + $0x50]]
          %v1170 = vstv %s1168
          %v1171 = vmul.f32 %v1170, %v276
          %v1172 = vmul.f32 %v1170, %v277
          %v1173 = vmul.f32 %v1170, %v278
          %v1177 = vrot.slane %v1171, 3
          %v1178 = vrot.slane %v1172, 3
          %v1179 = vsel %vm655, %v1177, %v1178
          %v1180 = vrot.slane %v1173, 3
          %v1181 = vsel %vm655, %v1178, %v1180
          %v1185 = vadd.f32 %v1117, %v1177
          %v1186 = vadd.f32 %v1118, %v1179
          %v1187 = vadd.f32 %v1119, %v1181
          %v1188 = vstv %s1169
          %v1189 = vmul.f32 %v1188, %v280
          %v1190 = vmul.f32 %v1188, %v281
          %v1191 = vmul.f32 %v1188, %v282
          %v1195 = vrot.slane %v1189, 3
          %v1196 = vrot.slane %v1190, 3
          %v1197 = vsel %vm655, %v1195, %v1196
          %v1198 = vrot.slane %v1191, 3
          %v1199 = vsel %vm655, %v1196, %v1198
          %v1203 = vadd.f32 %v1135, %v1195
          %v1204 = vadd.f32 %v1136, %v1197
          %v1205 = vadd.f32 %v1137, %v1199
          %s1206 = sld [smem:[#allocation9 + $0x26]]
          %s1207 = sld [smem:[#allocation9 + $0x57]]
          %v1208 = vstv %s1206
          %v1209 = vmul.f32 %v1208, %v276
          %v1210 = vmul.f32 %v1208, %v277
          %v1211 = vmul.f32 %v1208, %v278
          %v1215 = vrot.slane %v1209, 5
          %v1216 = vrot.slane %v1210, 5
          %v1217 = vsel %vm726, %v1215, %v1216
          %v1218 = vrot.slane %v1211, 5
          %v1219 = vsel %vm726, %v1216, %v1218
          %v1223 = vadd.f32 %v1151, %v1215
          %v1224 = vadd.f32 %v1152, %v1217
          %v1225 = vadd.f32 %v1153, %v1219
          %v1226 = vstv %s1207
          %v1227 = vmul.f32 %v1226, %v280
          %v1228 = vmul.f32 %v1226, %v281
          %v1229 = vmul.f32 %v1226, %v282
          %v1233 = vrot.slane %v1227, 5
          %v1234 = vrot.slane %v1228, 5
          %v1235 = vsel %vm726, %v1233, %v1234
          %v1236 = vrot.slane %v1229, 5
          %v1237 = vsel %vm726, %v1234, %v1236
          %v1241 = vadd.f32 %v1165, %v1233
          %v1242 = vadd.f32 %v1166, %v1235
          %v1243 = vadd.f32 %v1167, %v1237
          %s1244 = sld [smem:[#allocation9 + $0x2d]]
          %s1245 = sld [smem:[#allocation9 + $0x5e]]
          %v1246 = vstv %s1244
          %v1247 = vmul.f32 %v1246, %v276
          %v1248 = vmul.f32 %v1246, %v277
          %v1249 = vmul.f32 %v1246, %v278
          %v1253 = vrot.slane %v1247, 5
          %v1254 = vrot.slane %v1248, 5
          %v1255 = vsel %vm726, %v1253, %v1254
          %v1256 = vrot.slane %v1249, 5
          %v1257 = vsel %vm726, %v1254, %v1256
          %v1261 = vadd.f32 %v1185, %v1253
          %v1262 = vadd.f32 %v1186, %v1255
          %v1263 = vadd.f32 %v1187, %v1257
          %v1264 = vstv %s1245
          %v1265 = vmul.f32 %v1264, %v280
          %v1266 = vmul.f32 %v1264, %v281
          %v1267 = vmul.f32 %v1264, %v282
          %v1271 = vrot.slane %v1265, 5
          %v1272 = vrot.slane %v1266, 5
          %v1273 = vsel %vm726, %v1271, %v1272
          %v1274 = vrot.slane %v1267, 5
          %v1275 = vsel %vm726, %v1272, %v1274
          %v1279 = vadd.f32 %v1203, %v1271
          %v1280 = vadd.f32 %v1204, %v1273
          %v1281 = vadd.f32 %v1205, %v1275
          %1282 = vrot.lane.b32.xlu0 %v275, 127
          %v1283 = vpop.permute.xlu0 %1282
          %1284 = vrot.lane.b32.xlu0 %v276, 127
          %v1285 = vpop.permute.xlu0 %1284
          %1286 = vrot.lane.b32.xlu0 %v277, 127
          %v1287 = vpop.permute.xlu0 %1286
          %1288 = vrot.lane.b32.xlu0 %v278, 127
          %v1289 = vpop.permute.xlu0 %1288
          %1290 = vrot.lane.b32.xlu0 %v279, 127
          %v1291 = vpop.permute.xlu0 %1290
          %1292 = vrot.lane.b32.xlu0 %v280, 127
          %v1293 = vpop.permute.xlu0 %1292
          %1294 = vrot.lane.b32.xlu0 %v281, 127
          %v1295 = vpop.permute.xlu0 %1294
          %1296 = vrot.lane.b32.xlu0 %v282, 127
          %v1297 = vpop.permute.xlu0 %1296
          %s1298 = sld [smem:[#allocation9 + $0x4]]
          %s1299 = sld [smem:[#allocation9 + $0x35]]
          %v1300 = vstv %s1298
          %v1301 = vmul.f32 %v1300, %v1283
          %v1302 = vmul.f32 %v1300, %v1285
          %v1303 = vmul.f32 %v1300, %v1287
          %v1304 = vadd.f32 %v1223, %v1301
          %v1305 = vadd.f32 %v1224, %v1302
          %v1306 = vadd.f32 %v1225, %v1303
          %v1307 = vstv %s1299
          %v1308 = vmul.f32 %v1307, %v1291
          %v1309 = vmul.f32 %v1307, %v1293
          %v1310 = vmul.f32 %v1307, %v1295
          %v1311 = vadd.f32 %v1241, %v1308
          %v1312 = vadd.f32 %v1242, %v1309
          %v1313 = vadd.f32 %v1243, %v1310
          %s1314 = sld [smem:[#allocation9 + $0xb]]
          %s1315 = sld [smem:[#allocation9 + $0x3c]]
          %v1316 = vstv %s1314
          %v1317 = vmul.f32 %v1316, %v1283
          %v1318 = vmul.f32 %v1316, %v1285
          %v1319 = vmul.f32 %v1316, %v1287
          %v1320 = vadd.f32 %v1261, %v1317
          %v1321 = vadd.f32 %v1262, %v1318
          %v1322 = vadd.f32 %v1263, %v1319
          %v1323 = vstv %s1315
          %v1324 = vmul.f32 %v1323, %v1291
          %v1325 = vmul.f32 %v1323, %v1293
          %v1326 = vmul.f32 %v1323, %v1295
          %v1327 = vadd.f32 %v1279, %v1324
          %v1328 = vadd.f32 %v1280, %v1325
          %v1329 = vadd.f32 %v1281, %v1326
          %s1330 = sld [smem:[#allocation9 + $0x12]]
          %s1331 = sld [smem:[#allocation9 + $0x43]]
          %v1332 = vstv %s1330
          %v1333 = vmul.f32 %v1332, %v1283
          %v1334 = vmul.f32 %v1332, %v1285
          %v1335 = vmul.f32 %v1332, %v1287
          %v1339 = vrot.slane %v1333, 2
          %v1340 = vrot.slane %v1334, 2
          %v1341 = vsel %vm340, %v1339, %v1340
          %v1342 = vrot.slane %v1335, 2
          %v1343 = vsel %vm340, %v1340, %v1342
          %v1347 = vadd.f32 %v1304, %v1341
          %v1348 = vadd.f32 %v1305, %v1343
          %v1349 = vadd.f32 %v1306, %v1342
          %v1350 = vstv %s1331
          %v1351 = vmul.f32 %v1350, %v1291
          %v1352 = vmul.f32 %v1350, %v1293
          %v1353 = vmul.f32 %v1350, %v1295
          %v1357 = vrot.slane %v1351, 2
          %v1358 = vrot.slane %v1352, 2
          %v1359 = vsel %vm340, %v1357, %v1358
          %v1360 = vrot.slane %v1353, 2
          %v1361 = vsel %vm340, %v1358, %v1360
          %v1365 = vadd.f32 %v1311, %v1359
          %v1366 = vadd.f32 %v1312, %v1361
          %v1367 = vadd.f32 %v1313, %v1360
          %s1368 = sld [smem:[#allocation9 + $0x19]]
          %s1369 = sld [smem:[#allocation9 + $0x4a]]
          %v1370 = vstv %s1368
          %v1371 = vmul.f32 %v1370, %v1285
          %v1372 = vmul.f32 %v1370, %v1287
          %v1375 = vrot.slane %v1371, 2
          %v1376 = vrot.slane %v1372, 2
          %v1377 = vsel %vm340, %v1375, %v1376
          %v1381 = vadd.f32 %v1320, %v1375
          %v1382 = vadd.f32 %v1321, %v1377
          %v1383 = vadd.f32 %v1322, %v1376
          %v1384 = vstv %s1369
          %v1385 = vmul.f32 %v1384, %v1293
          %v1386 = vmul.f32 %v1384, %v1295
          %v1389 = vrot.slane %v1385, 2
          %v1390 = vrot.slane %v1386, 2
          %v1391 = vsel %vm340, %v1389, %v1390
          %v1395 = vadd.f32 %v1327, %v1389
          %v1396 = vadd.f32 %v1328, %v1391
          %v1397 = vadd.f32 %v1329, %v1390
          %s1398 = sld [smem:[#allocation9 + $0x20]]
          %s1399 = sld [smem:[#allocation9 + $0x51]]
          %v1400 = vstv %s1398
          %v1401 = vmul.f32 %v1400, %v1285
          %v1402 = vmul.f32 %v1400, %v1287
          %v1403 = vmul.f32 %v1400, %v1289
          %v1407 = vrot.slane %v1401, 4
          %v1408 = vrot.slane %v1402, 4
          %v1409 = vsel %vm409, %v1407, %v1408
          %v1410 = vrot.slane %v1403, 4
          %v1411 = vsel %vm409, %v1408, %v1410
          %v1415 = vadd.f32 %v1347, %v1407
          %v1416 = vadd.f32 %v1348, %v1409
          %v1417 = vadd.f32 %v1349, %v1411
          %v1418 = vstv %s1399
          %v1419 = vmul.f32 %v1418, %v1293
          %v1420 = vmul.f32 %v1418, %v1295
          %v1421 = vmul.f32 %v1418, %v1297
          %v1425 = vrot.slane %v1419, 4
          %v1426 = vrot.slane %v1420, 4
          %v1427 = vsel %vm409, %v1425, %v1426
          %v1428 = vrot.slane %v1421, 4
          %v1429 = vsel %vm409, %v1426, %v1428
          %v1433 = vadd.f32 %v1365, %v1425
          %v1434 = vadd.f32 %v1366, %v1427
          %v1435 = vadd.f32 %v1367, %v1429
          %s1436 = sld [smem:[#allocation9 + $0x27]]
          %s1437 = sld [smem:[#allocation9 + $0x58]]
          %v1438 = vstv %s1436
          %v1439 = vmul.f32 %v1438, %v1285
          %v1440 = vmul.f32 %v1438, %v1287
          %v1441 = vmul.f32 %v1438, %v1289
          %v1445 = vrot.slane %v1439, 4
          %v1446 = vrot.slane %v1440, 4
          %v1447 = vsel %vm409, %v1445, %v1446
          %v1448 = vrot.slane %v1441, 4
          %v1449 = vsel %vm409, %v1446, %v1448
          %v1453 = vadd.f32 %v1381, %v1445
          %v1454 = vadd.f32 %v1382, %v1447
          %v1455 = vadd.f32 %v1383, %v1449
          %v1456 = vstv %s1437
          %v1457 = vmul.f32 %v1456, %v1293
          %v1458 = vmul.f32 %v1456, %v1295
          %v1459 = vmul.f32 %v1456, %v1297
          %v1463 = vrot.slane %v1457, 4
          %v1464 = vrot.slane %v1458, 4
          %v1465 = vsel %vm409, %v1463, %v1464
          %v1466 = vrot.slane %v1459, 4
          %v1467 = vsel %vm409, %v1464, %v1466
          %v1471 = vadd.f32 %v1395, %v1463
          %v1472 = vadd.f32 %v1396, %v1465
          %v1473 = vadd.f32 %v1397, %v1467
          %s1474 = sld [smem:[#allocation9 + $0x2e]]
          %s1475 = sld [smem:[#allocation9 + $0x5f]]
          %v1476 = vstv %s1474
          %v1477 = vmul.f32 %v1476, %v1285
          %v1478 = vmul.f32 %v1476, %v1287
          %v1479 = vmul.f32 %v1476, %v1289
          %v1483 = vrot.slane %v1477, 6
          %v1484 = vrot.slane %v1478, 6
          %v1485 = vsel %vm486, %v1483, %v1484
          %v1486 = vrot.slane %v1479, 6
          %v1487 = vsel %vm486, %v1484, %v1486
          %v1491 = vadd.f32 %v1415, %v1483
          %v1492 = vadd.f32 %v1416, %v1485
          %v1493 = vadd.f32 %v1417, %v1487
          %v1494 = vstv %s1475
          %v1495 = vmul.f32 %v1494, %v1293
          %v1496 = vmul.f32 %v1494, %v1295
          %v1497 = vmul.f32 %v1494, %v1297
          %v1501 = vrot.slane %v1495, 6
          %v1502 = vrot.slane %v1496, 6
          %v1503 = vsel %vm486, %v1501, %v1502
          %v1504 = vrot.slane %v1497, 6
          %v1505 = vsel %vm486, %v1502, %v1504
          %v1509 = vadd.f32 %v1433, %v1501
          %v1510 = vadd.f32 %v1434, %v1503
          %v1511 = vadd.f32 %v1435, %v1505
          %1512 = vrot.lane.b32.xlu0 %v275, 126
          %v1513 = vpop.permute.xlu0 %1512
          %1514 = vrot.lane.b32.xlu0 %v276, 126
          %v1515 = vpop.permute.xlu0 %1514
          %1516 = vrot.lane.b32.xlu0 %v277, 126
          %v1517 = vpop.permute.xlu0 %1516
          %1518 = vrot.lane.b32.xlu0 %v278, 126
          %v1519 = vpop.permute.xlu0 %1518
          %1520 = vrot.lane.b32.xlu0 %v279, 126
          %v1521 = vpop.permute.xlu0 %1520
          %1522 = vrot.lane.b32.xlu0 %v280, 126
          %v1523 = vpop.permute.xlu0 %1522
          %1524 = vrot.lane.b32.xlu0 %v281, 126
          %v1525 = vpop.permute.xlu0 %1524
          %1526 = vrot.lane.b32.xlu0 %v282, 126
          %v1527 = vpop.permute.xlu0 %1526
          %s1528 = sld [smem:[#allocation9 + $0x5]]
          %s1529 = sld [smem:[#allocation9 + $0x36]]
          %v1530 = vstv %s1528
          %v1531 = vmul.f32 %v1530, %v1513
          %v1532 = vmul.f32 %v1530, %v1515
          %v1533 = vmul.f32 %v1530, %v1517
          %v1537 = vrot.slane %v1531, 7
          %v1538 = vrot.slane %v1532, 7
          %v1539 = vsel %vm541, %v1537, %v1538
          %v1540 = vrot.slane %v1533, 7
          %v1541 = vsel %vm541, %v1538, %v1540
          %v1545 = vadd.f32 %v1453, %v1537
          %v1546 = vadd.f32 %v1454, %v1539
          %v1547 = vadd.f32 %v1455, %v1541
          %v1548 = vstv %s1529
          %v1549 = vmul.f32 %v1548, %v1521
          %v1550 = vmul.f32 %v1548, %v1523
          %v1551 = vmul.f32 %v1548, %v1525
          %v1555 = vrot.slane %v1549, 7
          %v1556 = vrot.slane %v1550, 7
          %v1557 = vsel %vm541, %v1555, %v1556
          %v1558 = vrot.slane %v1551, 7
          %v1559 = vsel %vm541, %v1556, %v1558
          %v1563 = vadd.f32 %v1471, %v1555
          %v1564 = vadd.f32 %v1472, %v1557
          %v1565 = vadd.f32 %v1473, %v1559
          %s1566 = sld [smem:[#allocation9 + $0xc]]
          %s1567 = sld [smem:[#allocation9 + $0x3d]]
          %v1568 = vstv %s1566
          %v1569 = vmul.f32 %v1568, %v1513
          %v1570 = vmul.f32 %v1568, %v1515
          %v1571 = vmul.f32 %v1568, %v1517
          %v1575 = vrot.slane %v1569, 1
          %v1576 = vrot.slane %v1570, 1
          %v1577 = vsel %vm580, %v1575, %v1576
          %v1578 = vrot.slane %v1571, 1
          %v1579 = vsel %vm580, %v1576, %v1578
          %v1583 = vadd.f32 %v1491, %v1577
          %v1584 = vadd.f32 %v1492, %v1579
          %v1585 = vadd.f32 %v1493, %v1578
          %v1586 = vstv %s1567
          %v1587 = vmul.f32 %v1586, %v1521
          %v1588 = vmul.f32 %v1586, %v1523
          %v1589 = vmul.f32 %v1586, %v1525
          %v1593 = vrot.slane %v1587, 1
          %v1594 = vrot.slane %v1588, 1
          %v1595 = vsel %vm580, %v1593, %v1594
          %v1596 = vrot.slane %v1589, 1
          %v1597 = vsel %vm580, %v1594, %v1596
          %v1601 = vadd.f32 %v1509, %v1595
          %v1602 = vadd.f32 %v1510, %v1597
          %v1603 = vadd.f32 %v1511, %v1596
          %s1604 = sld [smem:[#allocation9 + $0x13]]
          %s1605 = sld [smem:[#allocation9 + $0x44]]
          %v1606 = vstv %s1604
          %v1607 = vmul.f32 %v1606, %v1513
          %v1608 = vmul.f32 %v1606, %v1515
          %v1609 = vmul.f32 %v1606, %v1517
          %v1613 = vrot.slane %v1607, 1
          %v1614 = vrot.slane %v1608, 1
          %v1615 = vsel %vm580, %v1613, %v1614
          %v1616 = vrot.slane %v1609, 1
          %v1617 = vsel %vm580, %v1614, %v1616
          %v1621 = vadd.f32 %v1545, %v1615
          %v1622 = vadd.f32 %v1546, %v1617
          %v1623 = vadd.f32 %v1547, %v1616
          %v1624 = vstv %s1605
          %v1625 = vmul.f32 %v1624, %v1521
          %v1626 = vmul.f32 %v1624, %v1523
          %v1627 = vmul.f32 %v1624, %v1525
          %v1631 = vrot.slane %v1625, 1
          %v1632 = vrot.slane %v1626, 1
          %v1633 = vsel %vm580, %v1631, %v1632
          %v1634 = vrot.slane %v1627, 1
          %v1635 = vsel %vm580, %v1632, %v1634
          %v1639 = vadd.f32 %v1563, %v1633
          %v1640 = vadd.f32 %v1564, %v1635
          %v1641 = vadd.f32 %v1565, %v1634
          %s1642 = sld [smem:[#allocation9 + $0x1a]]
          %s1643 = sld [smem:[#allocation9 + $0x4b]]
          %v1644 = vstv %s1642
          %v1645 = vmul.f32 %v1644, %v1515
          %v1646 = vmul.f32 %v1644, %v1517
          %v1649 = vrot.slane %v1645, 3
          %v1650 = vrot.slane %v1646, 3
          %v1651 = vsel %vm655, %v1649, %v1650
          %v1655 = vadd.f32 %v1583, %v1649
          %v1656 = vadd.f32 %v1584, %v1651
          %v1657 = vadd.f32 %v1585, %v1650
          %v1658 = vstv %s1643
          %v1659 = vmul.f32 %v1658, %v1523
          %v1660 = vmul.f32 %v1658, %v1525
          %v1663 = vrot.slane %v1659, 3
          %v1664 = vrot.slane %v1660, 3
          %v1665 = vsel %vm655, %v1663, %v1664
          %v1669 = vadd.f32 %v1601, %v1663
          %v1670 = vadd.f32 %v1602, %v1665
          %v1671 = vadd.f32 %v1603, %v1664
          %s1672 = sld [smem:[#allocation9 + $0x21]]
          %s1673 = sld [smem:[#allocation9 + $0x52]]
          %v1674 = vstv %s1672
          %v1675 = vmul.f32 %v1674, %v1515
          %v1676 = vmul.f32 %v1674, %v1517
          %v1677 = vmul.f32 %v1674, %v1519
          %v1681 = vrot.slane %v1675, 3
          %v1682 = vrot.slane %v1676, 3
          %v1683 = vsel %vm655, %v1681, %v1682
          %v1684 = vrot.slane %v1677, 3
          %v1685 = vsel %vm655, %v1682, %v1684
          %v1689 = vadd.f32 %v1621, %v1681
          %v1690 = vadd.f32 %v1622, %v1683
          %v1691 = vadd.f32 %v1623, %v1685
          %v1692 = vstv %s1673
          %v1693 = vmul.f32 %v1692, %v1523
          %v1694 = vmul.f32 %v1692, %v1525
          %v1695 = vmul.f32 %v1692, %v1527
          %v1699 = vrot.slane %v1693, 3
          %v1700 = vrot.slane %v1694, 3
          %v1701 = vsel %vm655, %v1699, %v1700
          %v1702 = vrot.slane %v1695, 3
          %v1703 = vsel %vm655, %v1700, %v1702
          %v1707 = vadd.f32 %v1639, %v1699
          %v1708 = vadd.f32 %v1640, %v1701
          %v1709 = vadd.f32 %v1641, %v1703
          %s1710 = sld [smem:[#allocation9 + $0x28]]
          %s1711 = sld [smem:[#allocation9 + $0x59]]
          %v1712 = vstv %s1710
          %v1713 = vmul.f32 %v1712, %v1515
          %v1714 = vmul.f32 %v1712, %v1517
          %v1715 = vmul.f32 %v1712, %v1519
          %v1719 = vrot.slane %v1713, 5
          %v1720 = vrot.slane %v1714, 5
          %v1721 = vsel %vm726, %v1719, %v1720
          %v1722 = vrot.slane %v1715, 5
          %v1723 = vsel %vm726, %v1720, %v1722
          %v1727 = vadd.f32 %v1655, %v1719
          %v1728 = vadd.f32 %v1656, %v1721
          %v1729 = vadd.f32 %v1657, %v1723
          %v1730 = vstv %s1711
          %v1731 = vmul.f32 %v1730, %v1523
          %v1732 = vmul.f32 %v1730, %v1525
          %v1733 = vmul.f32 %v1730, %v1527
          %v1737 = vrot.slane %v1731, 5
          %v1738 = vrot.slane %v1732, 5
          %v1739 = vsel %vm726, %v1737, %v1738
          %v1740 = vrot.slane %v1733, 5
          %v1741 = vsel %vm726, %v1738, %v1740
          %v1745 = vadd.f32 %v1669, %v1737
          %v1746 = vadd.f32 %v1670, %v1739
          %v1747 = vadd.f32 %v1671, %v1741
          %s1748 = sld [smem:[#allocation9 + $0x2f]]
          %s1749 = sld [smem:[#allocation9 + $0x60]]
          %v1750 = vstv %s1748
          %v1751 = vmul.f32 %v1750, %v1515
          %v1752 = vmul.f32 %v1750, %v1517
          %v1753 = vmul.f32 %v1750, %v1519
          %v1757 = vrot.slane %v1751, 5
          %v1758 = vrot.slane %v1752, 5
          %v1759 = vsel %vm726, %v1757, %v1758
          %v1760 = vrot.slane %v1753, 5
          %v1761 = vsel %vm726, %v1758, %v1760
          %v1765 = vadd.f32 %v1689, %v1757
          %v1766 = vadd.f32 %v1690, %v1759
          %v1767 = vadd.f32 %v1691, %v1761
          %v1768 = vstv %s1749
          %v1769 = vmul.f32 %v1768, %v1523
          %v1770 = vmul.f32 %v1768, %v1525
          %v1771 = vmul.f32 %v1768, %v1527
          %v1775 = vrot.slane %v1769, 5
          %v1776 = vrot.slane %v1770, 5
          %v1777 = vsel %vm726, %v1775, %v1776
          %v1778 = vrot.slane %v1771, 5
          %v1779 = vsel %vm726, %v1776, %v1778
          %v1783 = vadd.f32 %v1707, %v1775
          %v1784 = vadd.f32 %v1708, %v1777
          %v1785 = vadd.f32 %v1709, %v1779
          %1786 = vrot.lane.b32.xlu0 %v275, 125
          %v1787 = vpop.permute.xlu0 %1786
          %1788 = vrot.lane.b32.xlu0 %v276, 125
          %v1789 = vpop.permute.xlu0 %1788
          %1790 = vrot.lane.b32.xlu0 %v277, 125
          %v1791 = vpop.permute.xlu0 %1790
          %1792 = vrot.lane.b32.xlu0 %v278, 125
          %v1793 = vpop.permute.xlu0 %1792
          %1794 = vrot.lane.b32.xlu0 %v279, 125
          %v1795 = vpop.permute.xlu0 %1794
          %1796 = vrot.lane.b32.xlu0 %v280, 125
          %v1797 = vpop.permute.xlu0 %1796
          %1798 = vrot.lane.b32.xlu0 %v281, 125
          %v1799 = vpop.permute.xlu0 %1798
          %1800 = vrot.lane.b32.xlu0 %v282, 125
          %v1801 = vpop.permute.xlu0 %1800
          %s1802 = sld [smem:[#allocation9 + $0x6]]
          %s1803 = sld [smem:[#allocation9 + $0x37]]
          %v1804 = vstv %s1802
          %v1805 = vmul.f32 %v1804, %v1787
          %v1806 = vmul.f32 %v1804, %v1789
          %v1807 = vmul.f32 %v1804, %v1791
          %v1808 = vadd.f32 %v1727, %v1805
          %v1809 = vadd.f32 %v1728, %v1806
          %v1810 = vadd.f32 %v1729, %v1807
          %v1811 = vstv %s1803
          %v1812 = vmul.f32 %v1811, %v1795
          %v1813 = vmul.f32 %v1811, %v1797
          %v1814 = vmul.f32 %v1811, %v1799
          %v1815 = vadd.f32 %v1745, %v1812
          %v1816 = vadd.f32 %v1746, %v1813
          %v1817 = vadd.f32 %v1747, %v1814
          %s1818 = sld [smem:[#allocation9 + $0xd]]
          %s1819 = sld [smem:[#allocation9 + $0x3e]]
          %v1820 = vstv %s1818
          %v1821 = vmul.f32 %v1820, %v1787
          %v1822 = vmul.f32 %v1820, %v1789
          %v1823 = vmul.f32 %v1820, %v1791
          %v1824 = vadd.f32 %v1765, %v1821
          %v1825 = vadd.f32 %v1766, %v1822
          %v1826 = vadd.f32 %v1767, %v1823
          %v1827 = vstv %s1819
          %v1828 = vmul.f32 %v1827, %v1795
          %v1829 = vmul.f32 %v1827, %v1797
          %v1830 = vmul.f32 %v1827, %v1799
          %v1831 = vadd.f32 %v1783, %v1828
          %v1832 = vadd.f32 %v1784, %v1829
          %v1833 = vadd.f32 %v1785, %v1830
          %s1834 = sld [smem:[#allocation9 + $0x14]]
          %s1835 = sld [smem:[#allocation9 + $0x45]]
          %v1836 = vstv %s1834
          %v1837 = vmul.f32 %v1836, %v1787
          %v1838 = vmul.f32 %v1836, %v1789
          %v1839 = vmul.f32 %v1836, %v1791
          %v1843 = vrot.slane %v1837, 2
          %v1844 = vrot.slane %v1838, 2
          %v1845 = vsel %vm340, %v1843, %v1844
          %v1846 = vrot.slane %v1839, 2
          %v1847 = vsel %vm340, %v1844, %v1846
          %v1851 = vadd.f32 %v1808, %v1845
          %v1852 = vadd.f32 %v1809, %v1847
          %v1853 = vadd.f32 %v1810, %v1846
          %v1854 = vstv %s1835
          %v1855 = vmul.f32 %v1854, %v1795
          %v1856 = vmul.f32 %v1854, %v1797
          %v1857 = vmul.f32 %v1854, %v1799
          %v1861 = vrot.slane %v1855, 2
          %v1862 = vrot.slane %v1856, 2
          %v1863 = vsel %vm340, %v1861, %v1862
          %v1864 = vrot.slane %v1857, 2
          %v1865 = vsel %vm340, %v1862, %v1864
          %v1869 = vadd.f32 %v1815, %v1863
          %v1870 = vadd.f32 %v1816, %v1865
          %v1871 = vadd.f32 %v1817, %v1864
          %s1872 = sld [smem:[#allocation9 + $0x1b]]
          %s1873 = sld [smem:[#allocation9 + $0x4c]]
          %v1874 = vstv %s1872
          %v1875 = vmul.f32 %v1874, %v1789
          %v1876 = vmul.f32 %v1874, %v1791
          %v1879 = vrot.slane %v1875, 2
          %v1880 = vrot.slane %v1876, 2
          %v1881 = vsel %vm340, %v1879, %v1880
          %v1885 = vadd.f32 %v1824, %v1879
          %v1886 = vadd.f32 %v1825, %v1881
          %v1887 = vadd.f32 %v1826, %v1880
          %v1888 = vstv %s1873
          %v1889 = vmul.f32 %v1888, %v1797
          %v1890 = vmul.f32 %v1888, %v1799
          %v1893 = vrot.slane %v1889, 2
          %v1894 = vrot.slane %v1890, 2
          %v1895 = vsel %vm340, %v1893, %v1894
          %v1899 = vadd.f32 %v1831, %v1893
          %v1900 = vadd.f32 %v1832, %v1895
          %v1901 = vadd.f32 %v1833, %v1894
          %s1902 = sld [smem:[#allocation9 + $0x22]]
          %s1903 = sld [smem:[#allocation9 + $0x53]]
          %v1904 = vstv %s1902
          %v1905 = vmul.f32 %v1904, %v1789
          %v1906 = vmul.f32 %v1904, %v1791
          %v1907 = vmul.f32 %v1904, %v1793
          %v1911 = vrot.slane %v1905, 4
          %v1912 = vrot.slane %v1906, 4
          %v1913 = vsel %vm409, %v1911, %v1912
          %v1914 = vrot.slane %v1907, 4
          %v1915 = vsel %vm409, %v1912, %v1914
          %v1919 = vadd.f32 %v1851, %v1911
          %v1920 = vadd.f32 %v1852, %v1913
          %v1921 = vadd.f32 %v1853, %v1915
          %v1922 = vstv %s1903
          %v1923 = vmul.f32 %v1922, %v1797
          %v1924 = vmul.f32 %v1922, %v1799
          %v1925 = vmul.f32 %v1922, %v1801
          %v1929 = vrot.slane %v1923, 4
          %v1930 = vrot.slane %v1924, 4
          %v1931 = vsel %vm409, %v1929, %v1930
          %v1932 = vrot.slane %v1925, 4
          %v1933 = vsel %vm409, %v1930, %v1932
          %v1937 = vadd.f32 %v1869, %v1929
          %v1938 = vadd.f32 %v1870, %v1931
          %v1939 = vadd.f32 %v1871, %v1933
          %s1940 = sld [smem:[#allocation9 + $0x29]]
          %s1941 = sld [smem:[#allocation9 + $0x5a]]
          %v1942 = vstv %s1940
          %v1943 = vmul.f32 %v1942, %v1789
          %v1944 = vmul.f32 %v1942, %v1791
          %v1945 = vmul.f32 %v1942, %v1793
          %v1949 = vrot.slane %v1943, 4
          %v1950 = vrot.slane %v1944, 4
          %v1951 = vsel %vm409, %v1949, %v1950
          %v1952 = vrot.slane %v1945, 4
          %v1953 = vsel %vm409, %v1950, %v1952
          %v1957 = vadd.f32 %v1885, %v1949
          %v1958 = vadd.f32 %v1886, %v1951
          %v1959 = vadd.f32 %v1887, %v1953
          %v1960 = vstv %s1941
          %v1961 = vmul.f32 %v1960, %v1797
          %v1962 = vmul.f32 %v1960, %v1799
          %v1963 = vmul.f32 %v1960, %v1801
          %v1967 = vrot.slane %v1961, 4
          %v1968 = vrot.slane %v1962, 4
          %v1969 = vsel %vm409, %v1967, %v1968
          %v1970 = vrot.slane %v1963, 4
          %v1971 = vsel %vm409, %v1968, %v1970
          %v1975 = vadd.f32 %v1899, %v1967
          %v1976 = vadd.f32 %v1900, %v1969
          %v1977 = vadd.f32 %v1901, %v1971
          %s1978 = sld [smem:[#allocation9 + $0x30]]
          %s1979 = sld [smem:[#allocation9 + $0x61]]
          %v1980 = vstv %s1978
          %v1981 = vmul.f32 %v1980, %v1789
          %v1982 = vmul.f32 %v1980, %v1791
          %v1983 = vmul.f32 %v1980, %v1793
          %v1987 = vrot.slane %v1981, 6
          %v1988 = vrot.slane %v1982, 6
          %v1989 = vsel %vm486, %v1987, %v1988
          %v1990 = vrot.slane %v1983, 6
          %v1991 = vsel %vm486, %v1988, %v1990
          %v1995 = vadd.f32 %v1919, %v1987
          %v1996 = vadd.f32 %v1920, %v1989
          %v1997 = vadd.f32 %v1921, %v1991
          %v1998 = vstv %s1979
          %v1999 = vmul.f32 %v1998, %v1797
          %v2000 = vmul.f32 %v1998, %v1799
          %v2001 = vmul.f32 %v1998, %v1801
          %v2005 = vrot.slane %v1999, 6
          %v2006 = vrot.slane %v2000, 6
          %v2007 = vsel %vm486, %v2005, %v2006
          %v2008 = vrot.slane %v2001, 6
          %v2009 = vsel %vm486, %v2006, %v2008
          %v2013 = vadd.f32 %v1937, %v2005
          %v2014 = vadd.f32 %v1938, %v2007
          %v2015 = vadd.f32 %v1939, %v2009
          %v2016 = vadd.f32 %v1995, %v2013
          %v2017 = vadd.f32 %v1996, %v2014
          %v2018 = vadd.f32 %v1997, %v2015
          %v2019 = vadd.f32 %v1957, %v1975
          %v2020 = vadd.f32 %v1958, %v1976
          %v2021 = vadd.f32 %v1959, %v1977
          %v2025 = vrot.slane %v2019, 1
          %v2026 = vrot.slane %v2020, 1
          %v2027 = vsel %vm580, %v2025, %v2026
          %v2028 = vrot.slane %v2021, 1
          %v2029 = vsel %vm580, %v2026, %v2028
          %v2033 = vadd.f32 %v2016, %v2027
          %v2034 = vadd.f32 %v2017, %v2029
          %v2035 = vadd.f32 %v2018, %v2028
          %s2036 = sld [smem:[#allocation4]]
          %v2037 = vstv %s2036
          %v2038 = vadd.f32 %v2033, %v2037
          %v2039 = vadd.f32 %v2034, %v2037
          %v2040 = vadd.f32 %v2035, %v2037
          %v2041 = vxor.u32 %v2038, 2147483648
          %v2042 = vxor.u32 %v2039, 2147483648
          %v2043 = vxor.u32 %v2040, 2147483648
          %v2044 = vmul.f32 %v2041, 1.442695
          %v2045 = vpow.pop %v2044
          %v2046 = vmul.f32 %v2042, 1.442695
          %v2047 = vpow.pop %v2046
          %v2048 = vmul.f32 %v2043, 1.442695
          %v2049 = vpow.pop %v2048
          %v2050 = vadd.f32 %v2045, 1.0
          %v2051 = vadd.f32 %v2047, 1.0
          %v2052 = vadd.f32 %v2049, 1.0
          %v2053 = vrcp.pop %v2050
          %v2054 = vmul.f32 1.0, %v2053
          %v2055 = vrcp.pop %v2051
          %v2056 = vmul.f32 1.0, %v2055
          %v2057 = vrcp.pop %v2052
          %v2058 = vmul.f32 1.0, %v2057
          %vm2059 = vcmask 130053
          %2060 = vst.msk [vmem:[%s220 - $0x5] sm:$0xe0] %vm2059, %v2054
          %2061 = vst.msk [vmem:[%s220 + $0x3] sm:$0xff] %vm226, %v2056
          %vm2062 = vcmask 126976
          %2063 = vst.msk [vmem:[%s220 + $0xb] sm:$0x1f] %vm2062, %v2058
        $region52: #{spatial_attention.1} parent=31 // pred_fallthru
          _
        %s2064 = sand.u32 %s112, 1
        %s2065 = scalar_lea.sflag [#allocation7], %s2064
        %s2066 = sand.u32 %s112, 1
        %s2067 = smul.addr %s2066, 16
        %s2068 = scalar_lea.vmem [#allocation10], %s2067
        // Predicated region
        $region53: #{spatial_attention.1} parent=31 // pred_check
          %p2069 = pneg %p122
        $region54: #{spatial_attention.1} parent=31 // pred_check_branch
          %2071 = sbr.rel (%p2069) target = $region56
        $region55: #{spatial_attention.1} parent=31 // pred_region
          %s2073 = ssub.s32 256, 256
          %2074 = vsyncadd %s2065, %s2073
          %s2075 = smul.addr %s26, 2
          %s2076 = smul.addr %s2075, 128
          %s2077 = scalar_lea.hbm %s3, %s2076
          %s2078 = sshll.u32 %s2068, 4
          %s2079 = int_to_ptr.vmem [resolvable:$true] %s2078
          %2084 = dma.vmem_to_hbm [thread:$0]  %s2079, 256, %s2077, %s2065, 128, 128, 8
        $region56: #{spatial_attention.1} parent=31 // pred_fallthru
          _
      $region32: #{spatial_attention.1} parent=5 // pred_fallthru
        _
      %p2085 = scmp.le.s32.totalorder 2, %s17
      // Predicated region
      $region57: #{spatial_attention.1} parent=5 // pred_check
        %p2086 = pneg %p2085
      $region58: #{spatial_attention.1} parent=5 // pred_check_branch
        %2088 = sbr.rel (%p2086) target = $region60
      $region59: #{spatial_attention.1} parent=5 // pred_region
        %s2089 = ssub.s32 %s17, 2
        // Predicated region
        $region61: #{spatial_attention.1} parent=59 // pred_check
          %p2090 = pneg %p128
        $region62: #{spatial_attention.1} parent=59 // pred_check_branch
          %2092 = sbr.rel (%p2090) target = $region64
        $region63: #{spatial_attention.1} parent=59 // pred_region
          %s2093 = sand.u32 %s113, 1
          %s2094 = scalar_lea.sflag [#allocation7], %s2093
          %s2095 = sand.u32 %s113, 1
          %s2096 = smul.addr %s2095, 16
          %s2097 = scalar_lea.vmem [#allocation10], %s2096
          %2098 = dma.done %s2094, 256
        $region64: #{spatial_attention.1} parent=59 // pred_fallthru
          _
      $region60: #{spatial_attention.1} parent=5 // pred_fallthru
        _
    $region6: #{spatial_attention.1} parent=1 // loop_footer
      %s21 = sadd.s32 1, %s17
    $region7: #{spatial_attention.1} parent=1 // loop_footer_branch
      %16 = sbr.rel target = $region3
    $region8: #{spatial_attention.1} parent=1 // loop_exit
      _
    %2099 = vsyncpa [#allocation6], 1
    %s2100 = scalar_lea.sflag [#allocation6], 1
    %2101 = vsyncpa %s2100, 1
    %2102 = vsyncpa [#allocation7], 1
    %s2103 = scalar_lea.sflag [#allocation7], 1
    %2104 = vsyncpa %s2103, 1
    %2105 = vsyncpa [#allocation8], 1
    %s2106 = scalar_lea.sflag [#allocation8], 1
    %2107 = vsyncpa %s2106, 1

</llo_original>
